<compile_context>
chip_gen: v7x
topology: tpu7x:2x2x1
jax: 0.10.0
libtpu: 0.0.40
codegen_flags: <defaults>
</compile_context>

<pallas_src>
import functools

import jax
import jax.numpy as jnp
from jax.experimental import pallas as pl
from jax.experimental.pallas import tpu as pltpu


PARAMS = dict(
    num_users=8,
    num_aps=8,
    input_feature_dim=3,
    max_conns_ap=4,
    phi_feature_dim=8,
    gamma_feature_dim=8,
    reduced_msg_input=True,   # required for the reference forward() to type-check
)


def _gnn_kernel(cg_ref, w_ref, b_ref, out_ref, *,
                TB, U, A, F, OC, offs, rows, inv_u1, inv_a1):
    M = TB * U
    LANES = A * OC

    x = cg_ref[...]                              # (M, A*IF) f32
    x_bf = x.astype(jnp.bfloat16)                # matmul operand (cast once)
    b_all = b_ref[...]                           # (8, LANES) f32

    def wmat(i):
        off = offs[i]
        return w_ref[off:off + rows[i], :]       # static, sublane-aligned bf16 slice

    def dot(a, i):
        a16 = a if a.dtype == jnp.bfloat16 else a.astype(jnp.bfloat16)
        return jnp.dot(a16, wmat(i), preferred_element_type=jnp.float32)

    def conv(a, wi, layer):
        return dot(a, wi) + b_all[layer:layer + 1, :]

    def conv_cat(a0, wi0, a1, wi1, layer):
        # cat([a0, a1], channel) @ W == a0 @ W_top + a1 @ W_bot  (no lane-axis concat)
        return dot(a0, wi0) + dot(a1, wi1) + b_all[layer:layer + 1, :]

    def relu(v):
        return jnp.maximum(v, 0.0)

    # channels [0:F] of each per-AP block pass through postprocess unchanged
    lane = jax.lax.broadcasted_iota(jnp.int32, (M, LANES), 1)
    cch = (lane & (OC - 1)) if (OC & (OC - 1)) == 0 else (lane % OC)
    keep = cch < F

    def postprocess(y):
        # channels [F:2F]: ((ones(U,U)-eye(U)) @ y)/(U-1) == (sum_u y - y)/(U-1)
        # (M,128) -> (TB, U=8, 128) is tile-aligned: one (8,128) vreg tile per batch.
        y3 = y.reshape(TB, U, LANES)
        ex = ((jnp.sum(y3, axis=1, keepdims=True) - y3) * inv_u1).reshape(M, LANES)
        return jnp.where(keep, y, ex)

    def mix_aps(y):
        # (y @ (ones(A,A)-eye(A)))/(A-1): all-AP total via lane-rotation log-tree (XLU)
        t = y
        s = OC
        while s < LANES:
            t = t + pltpu.roll(t, shift=s, axis=1)
            s *= 2
        return (t - y) * inv_a1

    # ---- phi1: phi(cat([cg, cg]))  (duplicated-input weight folded into matrix 0) ----
    h = postprocess(relu(conv(x_bf, 0, 0)))
    msgs = postprocess(conv(h, 1, 1))

    # ---- gamma1: gamma(cat([cg, msgs @ ex_A/(A-1)])) ----
    h = postprocess(relu(conv_cat(x_bf, 2, mix_aps(msgs), 3, 2)))
    r = postprocess(relu(conv(h, 4, 3)))

    # ---- phi2: phi(cat([cg, r])) ----
    h = postprocess(relu(conv_cat(x_bf, 5, r, 6, 4)))
    msgs = postprocess(conv(h, 7, 5))

    # ---- gamma2 (final): gamma(cat([r, msgs @ ex_A/(A-1)])), no trailing postprocess ----
    h = postprocess(relu(conv_cat(r, 8, mix_aps(msgs), 9, 6)))
    y = conv(h, 10, 7)

    # softplus(y)/10, numerically stable (matches torch softplus, beta=1, to a few ULPs).
    # Padded output channels have zero weight/bias -> finite values; wrapper slices them off.
    sp = jnp.maximum(y, 0.0) + jnp.log(1.0 + jnp.exp(-jnp.abs(y)))
    out_ref[...] = sp * 0.1


def pack_gnn_weights(conv_params, params):
    """Pack per-layer (W (OC, IC), b (OC,)) PyTorch-style 1x1-conv parameters.

    Layer order (execution order): phi1.conv1, phi1.conv2, gamma1.conv1, gamma1.conv2,
    phi2.conv1, phi2.conv2, gamma2.conv1, gamma2.conv2.
    phi1.conv1's duplicated cat([cg, cg]) input is folded: W -> W[:, :IF] + W[:, IF:].
    Concat layers are split into top/bottom parts (no in-kernel lane concat).
    Each part is transposed, OC-padded and expanded to kron(I_A, W) (block-diagonal,
    bf16) so the kernel's activations can stay lane-dense (minor dim A*OC = 128).
    Returns (w_packed (sum_rows, A*OC) bf16, b_packed (8, A*OC) f32, offsets, rows).
    """
    IF = params['input_feature_dim'] + 1 + params['max_conns_ap']
    F_phi, F_gam = params['phi_feature_dim'], params['gamma_feature_dim']
    assert params['reduced_msg_input'], "forward() only type-checks with reduced_msg_input=True"
    assert F_phi == F_gam, "kernel assumes phi_feature_dim == gamma_feature_dim"
    F = F_phi
    OC = 2 * F
    A = params['num_aps']

    ws = [jnp.asarray(w, jnp.float32) for w, _ in conv_params]
    bs = [jnp.asarray(b, jnp.float32) for _, b in conv_params]

    w0 = ws[0][:, :IF] + ws[0][:, IF:]            # exact fold of the cat([cg, cg]) input

    # Per-dot weight parts, execution order (splits follow the reference cat order).
    parts = [
        w0,                                       # 0 : phi1.conv1 (folded), ic=IF
        ws[1],                                    # 1 : phi1.conv2
        ws[2][:, :IF], ws[2][:, IF:],             # 2,3: gamma1.conv1 [cg | agg_msgs]
        ws[3],                                    # 4 : gamma1.conv2
        ws[4][:, :IF], ws[4][:, IF:],             # 5,6: phi2.conv1 [cg | r]
        ws[5],                                    # 7 : phi2.conv2
        ws[6][:, :2 * F], ws[6][:, 2 * F:],       # 8,9: gamma2.conv1 [r | agg_msgs]
        ws[7],                                    # 10: gamma2.conv2 (oc=max_conns_ap, OC-padded)
    ]

    eyeA = jnp.eye(A, dtype=jnp.float32)
    blocks, offs, rows = [], [], []
    off = 0
    for w in parts:
        oc, ic = w.shape
        assert oc <= OC
        assert (A * ic) % 16 == 0, "bf16 sublane alignment of packed weight slices"
        wt = jnp.zeros((ic, OC), jnp.float32).at[:, :oc].set(w.T)   # pre-transpose + pad OC
        blocks.append(jnp.kron(eyeA, wt))          # (A*ic, A*OC) block-diagonal
        offs.append(off)
        rows.append(A * ic)
        off += A * ic
    w_packed = jnp.concatenate(blocks, axis=0).astype(jnp.bfloat16)

    b_rows = []
    for b in bs:
        bp = jnp.zeros((OC,), jnp.float32).at[:b.shape[0]].set(b)
        b_rows.append(jnp.tile(bp, A))             # (A*OC,) replicated across APs
    b_packed = jnp.stack(b_rows, axis=0)           # (8, A*OC) f32

    return w_packed, b_packed, tuple(offs), tuple(rows)


def gnn_refinement(channel_gains, w_packed, b_packed, offs, rows, params, *,
                   batch_tile=256, vmem_limit_bytes=48 * 1024 * 1024):
    B, U, A, IF = channel_gains.shape
    F = params['phi_feature_dim']
    OC = 2 * F
    oc_out = params['max_conns_ap']
    LANES = A * OC
    assert U == params['num_users'] and A == params['num_aps']
    assert (A & (A - 1)) == 0, "cross-AP roll-tree requires power-of-two num_aps"

    TB = max(1, min(batch_tile, B))
    n_blocks = pl.cdiv(B, TB)
    if n_blocks > 1 and n_blocks % 2:
        n_blocks += 1                             # even grid keeps both v7x TensorCores busy
    Bp = n_blocks * TB
    assert (TB * U) % 8 == 0, "batch tile rows must be sublane-aligned"

    # Lane-dense 2-D slab: row = (batch, user), lanes = (ap-major, channel-minor).
    cg2d = channel_gains.astype(jnp.float32).reshape(B * U, A * IF)
    if Bp != B:
        cg2d = jnp.pad(cg2d, ((0, (Bp - B) * U), (0, 0)))

    # Degenerate N==1 matches the (ones - eye) == 0 matrix (all-zeros), not inf/nan.
    inv_u1 = 0.0 if U <= 1 else 1.0 / (U - 1)
    inv_a1 = 0.0 if A <= 1 else 1.0 / (A - 1)

    kern = functools.partial(_gnn_kernel, TB=TB, U=U, A=A, F=F, OC=OC,
                             offs=offs, rows=rows, inv_u1=inv_u1, inv_a1=inv_a1)

    total_rows = int(w_packed.shape[0])
    cost = pl.CostEstimate(
        flops=2 * Bp * U * total_rows * LANES,
        transcendentals=2 * Bp * U * LANES,
        bytes_accessed=4 * Bp * U * (A * IF + LANES)
                       + 2 * int(w_packed.size) + 4 * int(b_packed.size))

    out2d = pl.pallas_call(
        kern,
        out_shape=jax.ShapeDtypeStruct((Bp * U, LANES), jnp.float32),
        grid_spec=pltpu.PrefetchScalarGridSpec(
            num_scalar_prefetch=0,
            grid=(n_blocks,),
            in_specs=[
                pl.BlockSpec((TB * U, A * IF), lambda b: (b, 0)),
                pl.BlockSpec(w_packed.shape, lambda b: (0, 0)),
                pl.BlockSpec(b_packed.shape, lambda b: (0, 0)),
            ],
            out_specs=pl.BlockSpec((TB * U, LANES), lambda b: (b, 0)),
        ),
        compiler_params=pltpu.CompilerParams(
            dimension_semantics=("parallel",),
            vmem_limit_bytes=vmem_limit_bytes),
        cost_estimate=cost,
    )(cg2d, w_packed, b_packed)

    # Lane-dense slab back to (B, U, A, oc_out): pure layout plumbing in the wrapper.
    return out2d[:B * U].reshape(B, U, A, OC)[..., :oc_out]


def gnn_reference(channel_gains, conv_params, params):
    """Pure-JAX f32 reference of GNNRefinement.forward (channels-last layout)."""
    U, A = params['num_users'], params['num_aps']
    F = params['phi_feature_dim']
    cg = channel_gains.astype(jnp.float32)

    def conv(x, wb):
        w, b = wb
        return jnp.einsum('buai,oi->buao', x, jnp.asarray(w, jnp.float32)) \
            + jnp.asarray(b, jnp.float32)

    def post(y):
        hi = (jnp.sum(y[..., F:2 * F], axis=1, keepdims=True) - y[..., F:2 * F]) / (U - 1)
        return jnp.concatenate([y[..., :F], hi], axis=-1)

    def agg(m):
        return (jnp.sum(m, axis=2, keepdims=True) - m) / (A - 1)

    relu = jax.nn.relu
    h = post(relu(conv(jnp.concatenate([cg, cg], -1), conv_params[0])))         # phi1
    msgs = post(conv(h, conv_params[1]))
    h = post(relu(conv(jnp.concatenate([cg, agg(msgs)], -1), conv_params[2])))  # gamma1
    r = post(relu(conv(h, conv_params[3])))
    h = post(relu(conv(jnp.concatenate([cg, r], -1), conv_params[4])))          # phi2
    msgs = post(conv(h, conv_params[5]))
    h = post(relu(conv(jnp.concatenate([r, agg(msgs)], -1), conv_params[6])))   # gamma2
    y = conv(h, conv_params[7])
    return jax.nn.softplus(y) / 10.0


def _init_conv(key, oc, ic):
    # deterministic PyTorch-style uniform(-1/sqrt(fan_in), 1/sqrt(fan_in)) init
    k1, k2 = jax.random.split(key)
    bound = 1.0 / (ic ** 0.5)
    w = jax.random.uniform(k1, (oc, ic), jnp.float32, -bound, bound)
    b = jax.random.uniform(k2, (oc,), jnp.float32, -bound, bound)
    return w, b


if __name__ == "__main__":
    p = PARAMS
    U, A = p['num_users'], p['num_aps']
    IF = p['input_feature_dim'] + 1 + p['max_conns_ap']          # 8
    F_p, F_g = p['phi_feature_dim'], p['gamma_feature_dim']
    phi_out, gamma_out = 2 * F_p, 2 * F_g

    # (out_channels, in_channels) of each 1x1 conv, in execution order
    conv_dims = [
        (2 * F_p, 2 * IF),               (2 * F_p, 2 * F_p),             # phi1
        (2 * F_g, IF + phi_out),         (2 * F_g, 2 * F_g),             # gamma1
        (2 * F_p, IF + gamma_out),       (2 * F_p, 2 * F_p),             # phi2
        (2 * F_g, gamma_out + phi_out),  (p['max_conns_ap'], 2 * F_g),   # gamma2
    ]

    key = jax.random.PRNGKey(0)
    keys = jax.random.split(key, len(conv_dims) + 1)
    conv_params = [_init_conv(k, oc, ic) for k, (oc, ic) in zip(keys[:-1], conv_dims)]
    w_packed, b_packed, offs, rows = pack_gnn_weights(conv_params, p)

    B = 8
    channel_gains = jax.random.normal(keys[-1], (B, U, A, IF), jnp.float32)

    # batch_tile=4 -> 2 parallel grid steps even at this tiny B (keeps both v7x TCs busy);
    # for realistic batches use the default batch_tile=256 (sweep up to 512 on v5e/v6e).
    out = gnn_refinement(channel_gains, w_packed, b_packed, offs, rows, p, batch_tile=4)
    out = jax.block_until_ready(out)
    assert out.shape == (B, U, A, p['max_conns_ap'])
    assert bool(jnp.all(jnp.isfinite(out)))

    # Validate bf16-matmul kernel against the f32 pure-JAX reference (loose tolerance).
    ref = gnn_reference(channel_gains, conv_params, p)
    err = float(jnp.max(jnp.abs(out - ref)))
    assert err < 5e-2, f"max abs err vs f32 reference: {err}"
    print("KERNEL_OK")
</pallas_src>

<mosaic_0001>
module attributes {stable_mosaic.version = 11 : i64} {
  func.func @_gnn_kernel(%arg0: i32, %arg1: memref<32x64xf32, #tpu.memory_space<vmem>>, %arg2: memref<1216x128xbf16, #tpu.memory_space<vmem>>, %arg3: memref<8x128xf32, #tpu.memory_space<vmem>>, %arg4: memref<32x128xf32, #tpu.memory_space<vmem>>) attributes {dimension_semantics = [#tpu.dimension_semantics<parallel>], iteration_bounds = array<i64: 2>, scalar_prefetch = 0 : i64, scratch_operands = 0 : i64, tpu.core_type = #tpu.core_type<tc>, window_params = [{transform_indices = @transform_0, window_bounds = array<i64: 32, 64>}, {pipeline_mode = #tpu.pipeline_mode<synchronous>, transform_indices = @transform_1, window_bounds = array<i64: 1216, 128>}, {pipeline_mode = #tpu.pipeline_mode<synchronous>, transform_indices = @transform_2, window_bounds = array<i64: 8, 128>}, {transform_indices = @transform_3, window_bounds = array<i64: 32, 128>}]} {
    %c0 = arith.constant 0 : index
    %c0_0 = arith.constant 0 : index
    %0 = vector.load %arg1[%c0, %c0_0] : memref<32x64xf32, #tpu.memory_space<vmem>>, vector<32x64xf32>
    %1 = arith.truncf %0 : vector<32x64xf32> to vector<32x64xbf16>
    %c0_1 = arith.constant 0 : index
    %c0_2 = arith.constant 0 : index
    %2 = vector.load %arg3[%c0_1, %c0_2] : memref<8x128xf32, #tpu.memory_space<vmem>>, vector<8x128xf32>
    %3 = tpu.iota {dimensions = array<i32: 1>} : vector<32x128xi32>
    %c15_i32 = arith.constant 15 : i32
    %4 = vector.broadcast %c15_i32 : i32 to vector<32x128xi32>
    %5 = arith.andi %3, %4 : vector<32x128xi32>
    %c8_i32 = arith.constant 8 : i32
    %6 = vector.broadcast %c8_i32 : i32 to vector<32x128xi32>
    %7 = arith.cmpi slt, %5, %6 : vector<32x128xi32>
    %c0_3 = arith.constant 0 : index
    %c0_4 = arith.constant 0 : index
    %8 = vector.load %arg2[%c0_3, %c0_4] : memref<1216x128xbf16, #tpu.memory_space<vmem>>, vector<64x128xbf16>
    %cst = arith.constant dense<0.000000e+00> : vector<32x128xf32>
    %9 = tpu.matmul %1, %8, %cst {dimension_numbers = #tpu.dot_dimension_numbers<[1], [0], [0], [1], [0, 0, 1, 1], [], []>} : vector<32x64xbf16>, vector<64x128xbf16>, vector<32x128xf32> -> vector<32x128xf32>
    %10 = vector.extract_strided_slice %2 {offsets = [0, 0], sizes = [1, 128], strides = [1, 1]} : vector<8x128xf32> to vector<1x128xf32>
    %11 = vector.broadcast %10 : vector<1x128xf32> to vector<32x128xf32>
    %12 = arith.addf %9, %11 : vector<32x128xf32>
    %cst_5 = arith.constant 0.000000e+00 : f32
    %13 = vector.broadcast %cst_5 : f32 to vector<32x128xf32>
    %14 = arith.maximumf %12, %13 : vector<32x128xf32>
    %15 = vector.shape_cast %14 : vector<32x128xf32> to vector<4x8x128xf32>
    %cst_6 = arith.constant dense<0.000000e+00> : vector<4x128xf32>
    %16 = vector.multi_reduction <add>, %15, %cst_6 [1] : vector<4x8x128xf32> to vector<4x128xf32>
    %17 = vector.shape_cast %16 : vector<4x128xf32> to vector<4x1x128xf32>
    %18 = vector.broadcast %17 : vector<4x1x128xf32> to vector<4x8x128xf32>
    %19 = arith.subf %18, %15 : vector<4x8x128xf32>
    %cst_7 = arith.constant 0.142857149 : f32
    %20 = vector.broadcast %cst_7 : f32 to vector<4x8x128xf32>
    %21 = arith.mulf %19, %20 : vector<4x8x128xf32>
    %22 = vector.shape_cast %21 : vector<4x8x128xf32> to vector<32x128xf32>
    %23 = arith.select %7, %14, %22 : vector<32x128xi1>, vector<32x128xf32>
    %24 = arith.truncf %23 : vector<32x128xf32> to vector<32x128xbf16>
    %c64 = arith.constant 64 : index
    %c0_8 = arith.constant 0 : index
    %25 = vector.load %arg2[%c64, %c0_8] : memref<1216x128xbf16, #tpu.memory_space<vmem>>, vector<128x128xbf16>
    %cst_9 = arith.constant dense<0.000000e+00> : vector<32x128xf32>
    %26 = tpu.matmul %24, %25, %cst_9 {dimension_numbers = #tpu.dot_dimension_numbers<[1], [0], [0], [1], [0, 0, 1, 1], [], []>} : vector<32x128xbf16>, vector<128x128xbf16>, vector<32x128xf32> -> vector<32x128xf32>
    %27 = vector.extract_strided_slice %2 {offsets = [1, 0], sizes = [1, 128], strides = [1, 1]} : vector<8x128xf32> to vector<1x128xf32>
    %28 = vector.broadcast %27 : vector<1x128xf32> to vector<32x128xf32>
    %29 = arith.addf %26, %28 : vector<32x128xf32>
    %30 = vector.shape_cast %29 : vector<32x128xf32> to vector<4x8x128xf32>
    %cst_10 = arith.constant dense<0.000000e+00> : vector<4x128xf32>
    %31 = vector.multi_reduction <add>, %30, %cst_10 [1] : vector<4x8x128xf32> to vector<4x128xf32>
    %32 = vector.shape_cast %31 : vector<4x128xf32> to vector<4x1x128xf32>
    %33 = vector.broadcast %32 : vector<4x1x128xf32> to vector<4x8x128xf32>
    %34 = arith.subf %33, %30 : vector<4x8x128xf32>
    %cst_11 = arith.constant 0.142857149 : f32
    %35 = vector.broadcast %cst_11 : f32 to vector<4x8x128xf32>
    %36 = arith.mulf %34, %35 : vector<4x8x128xf32>
    %37 = vector.shape_cast %36 : vector<4x8x128xf32> to vector<32x128xf32>
    %38 = arith.select %7, %29, %37 : vector<32x128xi1>, vector<32x128xf32>
    %c16_i32 = arith.constant 16 : i32
    %39 = tpu.dynamic_rotate %38 by %c16_i32 dim 1 : vector<32x128xf32>, i32 -> vector<32x128xf32>
    %40 = arith.addf %38, %39 : vector<32x128xf32>
    %c32_i32 = arith.constant 32 : i32
    %41 = tpu.dynamic_rotate %40 by %c32_i32 dim 1 : vector<32x128xf32>, i32 -> vector<32x128xf32>
    %42 = arith.addf %40, %41 : vector<32x128xf32>
    %c64_i32 = arith.constant 64 : i32
    %43 = tpu.dynamic_rotate %42 by %c64_i32 dim 1 : vector<32x128xf32>, i32 -> vector<32x128xf32>
    %44 = arith.addf %42, %43 : vector<32x128xf32>
    %45 = arith.subf %44, %38 : vector<32x128xf32>
    %cst_12 = arith.constant 0.142857149 : f32
    %46 = vector.broadcast %cst_12 : f32 to vector<32x128xf32>
    %47 = arith.mulf %45, %46 : vector<32x128xf32>
    %c192 = arith.constant 192 : index
    %c0_13 = arith.constant 0 : index
    %48 = vector.load %arg2[%c192, %c0_13] : memref<1216x128xbf16, #tpu.memory_space<vmem>>, vector<64x128xbf16>
    %cst_14 = arith.constant dense<0.000000e+00> : vector<32x128xf32>
    %49 = tpu.matmul %1, %48, %cst_14 {dimension_numbers = #tpu.dot_dimension_numbers<[1], [0], [0], [1], [0, 0, 1, 1], [], []>} : vector<32x64xbf16>, vector<64x128xbf16>, vector<32x128xf32> -> vector<32x128xf32>
    %50 = arith.truncf %47 : vector<32x128xf32> to vector<32x128xbf16>
    %c256 = arith.constant 256 : index
    %c0_15 = arith.constant 0 : index
    %51 = vector.load %arg2[%c256, %c0_15] : memref<1216x128xbf16, #tpu.memory_space<vmem>>, vector<128x128xbf16>
    %cst_16 = arith.constant dense<0.000000e+00> : vector<32x128xf32>
    %52 = tpu.matmul %50, %51, %cst_16 {dimension_numbers = #tpu.dot_dimension_numbers<[1], [0], [0], [1], [0, 0, 1, 1], [], []>} : vector<32x128xbf16>, vector<128x128xbf16>, vector<32x128xf32> -> vector<32x128xf32>
    %53 = arith.addf %49, %52 : vector<32x128xf32>
    %54 = vector.extract_strided_slice %2 {offsets = [2, 0], sizes = [1, 128], strides = [1, 1]} : vector<8x128xf32> to vector<1x128xf32>
    %55 = vector.broadcast %54 : vector<1x128xf32> to vector<32x128xf32>
    %56 = arith.addf %53, %55 : vector<32x128xf32>
    %cst_17 = arith.constant 0.000000e+00 : f32
    %57 = vector.broadcast %cst_17 : f32 to vector<32x128xf32>
    %58 = arith.maximumf %56, %57 : vector<32x128xf32>
    %59 = vector.shape_cast %58 : vector<32x128xf32> to vector<4x8x128xf32>
    %cst_18 = arith.constant dense<0.000000e+00> : vector<4x128xf32>
    %60 = vector.multi_reduction <add>, %59, %cst_18 [1] : vector<4x8x128xf32> to vector<4x128xf32>
    %61 = vector.shape_cast %60 : vector<4x128xf32> to vector<4x1x128xf32>
    %62 = vector.broadcast %61 : vector<4x1x128xf32> to vector<4x8x128xf32>
    %63 = arith.subf %62, %59 : vector<4x8x128xf32>
    %cst_19 = arith.constant 0.142857149 : f32
    %64 = vector.broadcast %cst_19 : f32 to vector<4x8x128xf32>
    %65 = arith.mulf %63, %64 : vector<4x8x128xf32>
    %66 = vector.shape_cast %65 : vector<4x8x128xf32> to vector<32x128xf32>
    %67 = arith.select %7, %58, %66 : vector<32x128xi1>, vector<32x128xf32>
    %68 = arith.truncf %67 : vector<32x128xf32> to vector<32x128xbf16>
    %c384 = arith.constant 384 : index
    %c0_20 = arith.constant 0 : index
    %69 = vector.load %arg2[%c384, %c0_20] : memref<1216x128xbf16, #tpu.memory_space<vmem>>, vector<128x128xbf16>
    %cst_21 = arith.constant dense<0.000000e+00> : vector<32x128xf32>
    %70 = tpu.matmul %68, %69, %cst_21 {dimension_numbers = #tpu.dot_dimension_numbers<[1], [0], [0], [1], [0, 0, 1, 1], [], []>} : vector<32x128xbf16>, vector<128x128xbf16>, vector<32x128xf32> -> vector<32x128xf32>
    %71 = vector.extract_strided_slice %2 {offsets = [3, 0], sizes = [1, 128], strides = [1, 1]} : vector<8x128xf32> to vector<1x128xf32>
    %72 = vector.broadcast %71 : vector<1x128xf32> to vector<32x128xf32>
    %73 = arith.addf %70, %72 : vector<32x128xf32>
    %cst_22 = arith.constant 0.000000e+00 : f32
    %74 = vector.broadcast %cst_22 : f32 to vector<32x128xf32>
    %75 = arith.maximumf %73, %74 : vector<32x128xf32>
    %76 = vector.shape_cast %75 : vector<32x128xf32> to vector<4x8x128xf32>
    %cst_23 = arith.constant dense<0.000000e+00> : vector<4x128xf32>
    %77 = vector.multi_reduction <add>, %76, %cst_23 [1] : vector<4x8x128xf32> to vector<4x128xf32>
    %78 = vector.shape_cast %77 : vector<4x128xf32> to vector<4x1x128xf32>
    %79 = vector.broadcast %78 : vector<4x1x128xf32> to vector<4x8x128xf32>
    %80 = arith.subf %79, %76 : vector<4x8x128xf32>
    %cst_24 = arith.constant 0.142857149 : f32
    %81 = vector.broadcast %cst_24 : f32 to vector<4x8x128xf32>
    %82 = arith.mulf %80, %81 : vector<4x8x128xf32>
    %83 = vector.shape_cast %82 : vector<4x8x128xf32> to vector<32x128xf32>
    %84 = arith.select %7, %75, %83 : vector<32x128xi1>, vector<32x128xf32>
    %c512 = arith.constant 512 : index
    %c0_25 = arith.constant 0 : index
    %85 = vector.load %arg2[%c512, %c0_25] : memref<1216x128xbf16, #tpu.memory_space<vmem>>, vector<64x128xbf16>
    %cst_26 = arith.constant dense<0.000000e+00> : vector<32x128xf32>
    %86 = tpu.matmul %1, %85, %cst_26 {dimension_numbers = #tpu.dot_dimension_numbers<[1], [0], [0], [1], [0, 0, 1, 1], [], []>} : vector<32x64xbf16>, vector<64x128xbf16>, vector<32x128xf32> -> vector<32x128xf32>
    %87 = arith.truncf %84 : vector<32x128xf32> to vector<32x128xbf16>
    %c576 = arith.constant 576 : index
    %c0_27 = arith.constant 0 : index
    %88 = vector.load %arg2[%c576, %c0_27] : memref<1216x128xbf16, #tpu.memory_space<vmem>>, vector<128x128xbf16>
    %cst_28 = arith.constant dense<0.000000e+00> : vector<32x128xf32>
    %89 = tpu.matmul %87, %88, %cst_28 {dimension_numbers = #tpu.dot_dimension_numbers<[1], [0], [0], [1], [0, 0, 1, 1], [], []>} : vector<32x128xbf16>, vector<128x128xbf16>, vector<32x128xf32> -> vector<32x128xf32>
    %90 = arith.addf %86, %89 : vector<32x128xf32>
    %91 = vector.extract_strided_slice %2 {offsets = [4, 0], sizes = [1, 128], strides = [1, 1]} : vector<8x128xf32> to vector<1x128xf32>
    %92 = vector.broadcast %91 : vector<1x128xf32> to vector<32x128xf32>
    %93 = arith.addf %90, %92 : vector<32x128xf32>
    %cst_29 = arith.constant 0.000000e+00 : f32
    %94 = vector.broadcast %cst_29 : f32 to vector<32x128xf32>
    %95 = arith.maximumf %93, %94 : vector<32x128xf32>
    %96 = vector.shape_cast %95 : vector<32x128xf32> to vector<4x8x128xf32>
    %cst_30 = arith.constant dense<0.000000e+00> : vector<4x128xf32>
    %97 = vector.multi_reduction <add>, %96, %cst_30 [1] : vector<4x8x128xf32> to vector<4x128xf32>
    %98 = vector.shape_cast %97 : vector<4x128xf32> to vector<4x1x128xf32>
    %99 = vector.broadcast %98 : vector<4x1x128xf32> to vector<4x8x128xf32>
    %100 = arith.subf %99, %96 : vector<4x8x128xf32>
    %cst_31 = arith.constant 0.142857149 : f32
    %101 = vector.broadcast %cst_31 : f32 to vector<4x8x128xf32>
    %102 = arith.mulf %100, %101 : vector<4x8x128xf32>
    %103 = vector.shape_cast %102 : vector<4x8x128xf32> to vector<32x128xf32>
    %104 = arith.select %7, %95, %103 : vector<32x128xi1>, vector<32x128xf32>
    %105 = arith.truncf %104 : vector<32x128xf32> to vector<32x128xbf16>
    %c704 = arith.constant 704 : index
    %c0_32 = arith.constant 0 : index
    %106 = vector.load %arg2[%c704, %c0_32] : memref<1216x128xbf16, #tpu.memory_space<vmem>>, vector<128x128xbf16>
    %cst_33 = arith.constant dense<0.000000e+00> : vector<32x128xf32>
    %107 = tpu.matmul %105, %106, %cst_33 {dimension_numbers = #tpu.dot_dimension_numbers<[1], [0], [0], [1], [0, 0, 1, 1], [], []>} : vector<32x128xbf16>, vector<128x128xbf16>, vector<32x128xf32> -> vector<32x128xf32>
    %108 = vector.extract_strided_slice %2 {offsets = [5, 0], sizes = [1, 128], strides = [1, 1]} : vector<8x128xf32> to vector<1x128xf32>
    %109 = vector.broadcast %108 : vector<1x128xf32> to vector<32x128xf32>
    %110 = arith.addf %107, %109 : vector<32x128xf32>
    %111 = vector.shape_cast %110 : vector<32x128xf32> to vector<4x8x128xf32>
    %cst_34 = arith.constant dense<0.000000e+00> : vector<4x128xf32>
    %112 = vector.multi_reduction <add>, %111, %cst_34 [1] : vector<4x8x128xf32> to vector<4x128xf32>
    %113 = vector.shape_cast %112 : vector<4x128xf32> to vector<4x1x128xf32>
    %114 = vector.broadcast %113 : vector<4x1x128xf32> to vector<4x8x128xf32>
    %115 = arith.subf %114, %111 : vector<4x8x128xf32>
    %cst_35 = arith.constant 0.142857149 : f32
    %116 = vector.broadcast %cst_35 : f32 to vector<4x8x128xf32>
    %117 = arith.mulf %115, %116 : vector<4x8x128xf32>
    %118 = vector.shape_cast %117 : vector<4x8x128xf32> to vector<32x128xf32>
    %119 = arith.select %7, %110, %118 : vector<32x128xi1>, vector<32x128xf32>
    %c16_i32_36 = arith.constant 16 : i32
    %120 = tpu.dynamic_rotate %119 by %c16_i32_36 dim 1 : vector<32x128xf32>, i32 -> vector<32x128xf32>
    %121 = arith.addf %119, %120 : vector<32x128xf32>
    %c32_i32_37 = arith.constant 32 : i32
    %122 = tpu.dynamic_rotate %121 by %c32_i32_37 dim 1 : vector<32x128xf32>, i32 -> vector<32x128xf32>
    %123 = arith.addf %121, %122 : vector<32x128xf32>
    %c64_i32_38 = arith.constant 64 : i32
    %124 = tpu.dynamic_rotate %123 by %c64_i32_38 dim 1 : vector<32x128xf32>, i32 -> vector<32x128xf32>
    %125 = arith.addf %123, %124 : vector<32x128xf32>
    %126 = arith.subf %125, %119 : vector<32x128xf32>
    %cst_39 = arith.constant 0.142857149 : f32
    %127 = vector.broadcast %cst_39 : f32 to vector<32x128xf32>
    %128 = arith.mulf %126, %127 : vector<32x128xf32>
    %129 = arith.truncf %84 : vector<32x128xf32> to vector<32x128xbf16>
    %c832 = arith.constant 832 : index
    %c0_40 = arith.constant 0 : index
    %130 = vector.load %arg2[%c832, %c0_40] : memref<1216x128xbf16, #tpu.memory_space<vmem>>, vector<128x128xbf16>
    %cst_41 = arith.constant dense<0.000000e+00> : vector<32x128xf32>
    %131 = tpu.matmul %129, %130, %cst_41 {dimension_numbers = #tpu.dot_dimension_numbers<[1], [0], [0], [1], [0, 0, 1, 1], [], []>} : vector<32x128xbf16>, vector<128x128xbf16>, vector<32x128xf32> -> vector<32x128xf32>
    %132 = arith.truncf %128 : vector<32x128xf32> to vector<32x128xbf16>
    %c960 = arith.constant 960 : index
    %c0_42 = arith.constant 0 : index
    %133 = vector.load %arg2[%c960, %c0_42] : memref<1216x128xbf16, #tpu.memory_space<vmem>>, vector<128x128xbf16>
    %cst_43 = arith.constant dense<0.000000e+00> : vector<32x128xf32>
    %134 = tpu.matmul %132, %133, %cst_43 {dimension_numbers = #tpu.dot_dimension_numbers<[1], [0], [0], [1], [0, 0, 1, 1], [], []>} : vector<32x128xbf16>, vector<128x128xbf16>, vector<32x128xf32> -> vector<32x128xf32>
    %135 = arith.addf %131, %134 : vector<32x128xf32>
    %136 = vector.extract_strided_slice %2 {offsets = [6, 0], sizes = [1, 128], strides = [1, 1]} : vector<8x128xf32> to vector<1x128xf32>
    %137 = vector.broadcast %136 : vector<1x128xf32> to vector<32x128xf32>
    %138 = arith.addf %135, %137 : vector<32x128xf32>
    %cst_44 = arith.constant 0.000000e+00 : f32
    %139 = vector.broadcast %cst_44 : f32 to vector<32x128xf32>
    %140 = arith.maximumf %138, %139 : vector<32x128xf32>
    %141 = vector.shape_cast %140 : vector<32x128xf32> to vector<4x8x128xf32>
    %cst_45 = arith.constant dense<0.000000e+00> : vector<4x128xf32>
    %142 = vector.multi_reduction <add>, %141, %cst_45 [1] : vector<4x8x128xf32> to vector<4x128xf32>
    %143 = vector.shape_cast %142 : vector<4x128xf32> to vector<4x1x128xf32>
    %144 = vector.broadcast %143 : vector<4x1x128xf32> to vector<4x8x128xf32>
    %145 = arith.subf %144, %141 : vector<4x8x128xf32>
    %cst_46 = arith.constant 0.142857149 : f32
    %146 = vector.broadcast %cst_46 : f32 to vector<4x8x128xf32>
    %147 = arith.mulf %145, %146 : vector<4x8x128xf32>
    %148 = vector.shape_cast %147 : vector<4x8x128xf32> to vector<32x128xf32>
    %149 = arith.select %7, %140, %148 : vector<32x128xi1>, vector<32x128xf32>
    %150 = arith.truncf %149 : vector<32x128xf32> to vector<32x128xbf16>
    %c1088 = arith.constant 1088 : index
    %c0_47 = arith.constant 0 : index
    %151 = vector.load %arg2[%c1088, %c0_47] : memref<1216x128xbf16, #tpu.memory_space<vmem>>, vector<128x128xbf16>
    %cst_48 = arith.constant dense<0.000000e+00> : vector<32x128xf32>
    %152 = tpu.matmul %150, %151, %cst_48 {dimension_numbers = #tpu.dot_dimension_numbers<[1], [0], [0], [1], [0, 0, 1, 1], [], []>} : vector<32x128xbf16>, vector<128x128xbf16>, vector<32x128xf32> -> vector<32x128xf32>
    %153 = vector.extract_strided_slice %2 {offsets = [7, 0], sizes = [1, 128], strides = [1, 1]} : vector<8x128xf32> to vector<1x128xf32>
    %154 = vector.broadcast %153 : vector<1x128xf32> to vector<32x128xf32>
    %155 = arith.addf %152, %154 : vector<32x128xf32>
    %cst_49 = arith.constant 0.000000e+00 : f32
    %156 = vector.broadcast %cst_49 : f32 to vector<32x128xf32>
    %157 = arith.maximumf %155, %156 : vector<32x128xf32>
    %158 = math.absf %155 : vector<32x128xf32>
    %cst_50 = arith.constant 0.000000e+00 : f32
    %159 = vector.broadcast %cst_50 : f32 to vector<32x128xf32>
    %160 = arith.subf %159, %158 : vector<32x128xf32>
    %161 = math.exp %160 : vector<32x128xf32>
    %cst_51 = arith.constant 1.000000e+00 : f32
    %162 = vector.broadcast %cst_51 : f32 to vector<32x128xf32>
    %163 = arith.addf %162, %161 : vector<32x128xf32>
    %164 = math.log %163 : vector<32x128xf32>
    %165 = arith.addf %157, %164 : vector<32x128xf32>
    %cst_52 = arith.constant 1.000000e-01 : f32
    %166 = vector.broadcast %cst_52 : f32 to vector<32x128xf32>
    %167 = arith.mulf %165, %166 : vector<32x128xf32>
    %c0_53 = arith.constant 0 : index
    %c0_54 = arith.constant 0 : index
    %168 = vector.load %arg4[%c0_53, %c0_54] : memref<32x128xf32, #tpu.memory_space<vmem>>, vector<32x128xf32>
    tpu.vector_store %arg4[%c0_53, %c0_54], %167 {strides = array<i32>} : memref<32x128xf32, #tpu.memory_space<vmem>>, vector<32x128xf32>,
    return
  }
  func.func @transform_0(%arg0: i32) -> (i32, i32) {
    %c0_i32 = arith.constant 0 : i32
    %c0_i32_0 = arith.constant 0 : i32
    return %arg0, %c0_i32 : i32, i32
  }
  func.func @transform_1(%arg0: i32) -> (i32, i32) {
    %c0_i32 = arith.constant 0 : i32
    %c0_i32_0 = arith.constant 0 : i32
    %c0_i32_1 = arith.constant 0 : i32
    return %c0_i32, %c0_i32_0 : i32, i32
  }
  func.func @transform_2(%arg0: i32) -> (i32, i32) {
    %c0_i32 = arith.constant 0 : i32
    %c0_i32_0 = arith.constant 0 : i32
    %c0_i32_1 = arith.constant 0 : i32
    return %c0_i32, %c0_i32_0 : i32, i32
  }
  func.func @transform_3(%arg0: i32) -> (i32, i32) {
    %c0_i32 = arith.constant 0 : i32
    %c0_i32_0 = arith.constant 0 : i32
    return %arg0, %c0_i32 : i32, i32
  }
}

</mosaic_0001>

<llo_original>
// kernel: tpu_custom_call.1
$region0: #{tpu_custom_call.1}
  #allocation0 [shape = 'u32[]', space=smem, size = 0x4, offset = 0x4, fixed_abs, tag = 'smem constant byte address 0x4 - core index']
  #allocation1 [shape = 'u32[144,128]{1,0:T(1,128)}', space=vmem, size = 0x12000, scoped, tag = 'internal scratch']
  %s0 = inlined_call_operand.hbm [shape: f32[64,64], index: 0, kind: input, shape index: {}]
  %s1 = inlined_call_operand.hbm [shape: bf16[1216,128], index: 1, kind: input, shape index: {}]
  %s2 = inlined_call_operand.hbm [shape: f32[8,128], index: 2, kind: input, shape index: {}]
  %s3 = inlined_call_operand.hbm [shape: f32[64,128], index: 3, kind: output, shape index: {}]
  %s4 = sld [smem:[#allocation0]]
  $region57: #{tpu_custom_call.1} parent=0
    _
  %s6 = ssub.s32 1, %s4
  %s7 = scalar_select 0, %s6, %s4
  $region1: #{tpu_custom_call.1} parent=0
    #allocation2 [shape = 'u8[32768]{0}', space=vmem, size = 0x8000, scoped, tag = 'input window, operand 0']
    #allocation3 [shape = 's32[2]{0}', space=sflag, size = 0x8, scoped, tag = 'scoped memory for tpu_custom_call.1']
    #allocation4 [shape = 's32[2]{0}', space=sflag, size = 0x8, scoped, tag = 'scoped memory for tpu_custom_call.1']
    #allocation5 [shape = 'u8[311296]{0}', space=vmem, size = 0x4c000, scoped, tag = 'input window, operand 1, single buffered']
    #allocation6 [shape = 's32[1]{0}', space=sflag, size = 0x4, scoped, tag = 'scoped memory for tpu_custom_call.1']
    #allocation7 [shape = 'u8[4096]{0}', space=vmem, size = 0x1000, scoped, tag = 'input window, operand 2, single buffered']
    #allocation8 [shape = 'u8[32768]{0}', space=vmem, size = 0x8000, scoped, tag = 'output window, operand 0']
    %8 = vsyncpa [#allocation3], 0
    %s9 = scalar_lea.sflag [#allocation3], 1
    %10 = vsyncpa %s9, 0
    %11 = vsyncpa [#allocation6], 0
    %12 = vsyncpa [#allocation4], 0
    %s13 = scalar_lea.sflag [#allocation4], 1
    %14 = vsyncpa %s13, 0
    loop: start=0, step=1, limit=4
    $region2: #{tpu_custom_call.1} parent=1 // loop_pre_header
      _
    $region3: #{tpu_custom_call.1} parent=1 // loop_header
      %s16 = sphi 0, %s20
      %p17 = scmp.ge.s32.totalorder %s16, 4
      %s26 = sphi 0, %s28
      %s29 = sphi 0, %s26
      %s30 = sphi 0, %s29
      %s46 = sphi 0, %s30
      %s50 = sphi 0, %s50
      %s52 = sphi 0, %s50
      %s53 = sphi 0, %s52
      %s67 = sphi 0, %s53
      %s71 = sphi 0, %s71
      %s73 = sphi 0, %s71
      %s74 = sphi 0, %s73
      %s88 = sphi 0, %s74
      %s94 = sphi 0, %s96
      %s97 = sphi 0, %s94
      %s98 = sphi 0, %s97
      %s114 = sphi 0, %s98
    $region4: #{tpu_custom_call.1} parent=1 // loop_header_branch
      %19 = sbr.rel (%p17) target = $region8
    $region5: #{tpu_custom_call.1} parent=1 // loop_body
      %s21 = ssub.s32 %s16, 1
      %s22 = ssub.s32 %s16, 2
      %s23 = sadd.s32 %s16, 1
      %s24 = ssub.s32 %s16, %s23
      %p25 = scmp.eq.s32.totalorder %s24, 0
      %s27 = sadd.s32 %s26, 1
      %s28 = scalar_select %p25, %s26, %s27
      %p31 = pneg %p25
      %p32 = scmp.eq.s32.totalorder %s16, 1
      %p33 = por %p31, %p32
      %p34 = scmp.ne.s32.totalorder %s26, %s29
      %p35 = scmp.eq.s32.totalorder %s16, 0
      %p36 = por %p34, %p35
      %p37 = scmp.ne.s32.totalorder %s26, %s29
      %p38 = scmp.eq.s32.totalorder %s21, 1
      %p39 = por %p37, %p38
      %p40 = scmp.ne.s32.totalorder %s29, %s30
      %p41 = scmp.eq.s32.totalorder %s21, 0
      %p42 = por %p40, %p41
      %p43 = scmp.ne.s32.totalorder %s29, %s30
      %p44 = scmp.eq.s32.totalorder %s22, 1
      %p45 = por %p43, %p44
      %p47 = scmp.ne.s32.totalorder %s30, %s46
      %p48 = scmp.eq.s32.totalorder %s22, 0
      %p49 = por %p47, %p48
      %s51 = sadd.s32 %s50, 1
      %p54 = scmp.eq.s32.totalorder %s16, 1
      %p55 = scmp.ne.s32.totalorder %s50, %s52
      %p56 = scmp.eq.s32.totalorder %s16, 0
      %p57 = por %p55, %p56
      %p58 = scmp.ne.s32.totalorder %s50, %s52
      %p59 = scmp.eq.s32.totalorder %s21, 1
      %p60 = por %p58, %p59
      %p61 = scmp.ne.s32.totalorder %s52, %s53
      %p62 = scmp.eq.s32.totalorder %s21, 0
      %p63 = por %p61, %p62
      %p64 = scmp.ne.s32.totalorder %s52, %s53
      %p65 = scmp.eq.s32.totalorder %s22, 1
      %p66 = por %p64, %p65
      %p68 = scmp.ne.s32.totalorder %s53, %s67
      %p69 = scmp.eq.s32.totalorder %s22, 0
      %p70 = por %p68, %p69
      %s72 = sadd.s32 %s71, 1
      %p75 = scmp.eq.s32.totalorder %s16, 1
      %p76 = scmp.ne.s32.totalorder %s71, %s73
      %p77 = scmp.eq.s32.totalorder %s16, 0
      %p78 = por %p76, %p77
      %p79 = scmp.ne.s32.totalorder %s71, %s73
      %p80 = scmp.eq.s32.totalorder %s21, 1
      %p81 = por %p79, %p80
      %p82 = scmp.ne.s32.totalorder %s73, %s74
      %p83 = scmp.eq.s32.totalorder %s21, 0
      %p84 = por %p82, %p83
      %p85 = scmp.ne.s32.totalorder %s73, %s74
      %p86 = scmp.eq.s32.totalorder %s22, 1
      %p87 = por %p85, %p86
      %p89 = scmp.ne.s32.totalorder %s74, %s88
      %p90 = scmp.eq.s32.totalorder %s22, 0
      %p91 = por %p89, %p90
      %s92 = ssub.s32 %s16, %s23
      %p93 = scmp.eq.s32.totalorder %s92, 0
      %s95 = sadd.s32 %s94, 1
      %s96 = scalar_select %p93, %s94, %s95
      %p99 = pneg %p93
      %p100 = scmp.eq.s32.totalorder %s16, 1
      %p101 = por %p99, %p100
      %p102 = scmp.ne.s32.totalorder %s94, %s97
      %p103 = scmp.eq.s32.totalorder %s16, 0
      %p104 = por %p102, %p103
      %p105 = scmp.ne.s32.totalorder %s94, %s97
      %p106 = scmp.eq.s32.totalorder %s21, 1
      %p107 = por %p105, %p106
      %p108 = scmp.ne.s32.totalorder %s97, %s98
      %p109 = scmp.eq.s32.totalorder %s21, 0
      %p110 = por %p108, %p109
      %p111 = scmp.ne.s32.totalorder %s97, %s98
      %p112 = scmp.eq.s32.totalorder %s22, 1
      %p113 = por %p111, %p112
      %p115 = scmp.ne.s32.totalorder %s98, %s114
      %p116 = scmp.eq.s32.totalorder %s22, 0
      %p117 = por %p115, %p116
      %p118 = scmp.le.s32.totalorder 1, %s16
      %p119 = scmp.lt.s32.totalorder %s16, 3
      %p120 = pnand %p118, %p119
      %p121 = pneg %p120
      // Predicated region
      $region9: #{tpu_custom_call.1} parent=5 // pred_check
        _
      $region10: #{tpu_custom_call.1} parent=5 // pred_check_branch
        %123 = sbr.rel (%p120) target = $region12
      $region11: #{tpu_custom_call.1} parent=5 // pred_region
        %s124 = ssub.s32 %s16, 1
        // Predicated region
        $region13: #{tpu_custom_call.1} parent=11 // pred_check
          %p125 = pneg %p63
        $region14: #{tpu_custom_call.1} parent=11 // pred_check_branch
          %127 = sbr.rel (%p125) target = $region16
        $region15: #{tpu_custom_call.1} parent=11 // pred_region
          %s129 = ssub.s32 9728, 9728
          %130 = vsyncadd [#allocation6], %s129
          %s131 = sshll.u32 [#allocation5], 4
          %s132 = int_to_ptr.vmem [resolvable:$true] %s131
          %137 = dma.hbm_to_vmem [thread:$0]  %s1, 9728, %s132, [#allocation6], 64, 64, 4
        $region16: #{tpu_custom_call.1} parent=11 // pred_fallthru
          _
        // Predicated region
        $region17: #{tpu_custom_call.1} parent=11 // pred_check
          %p138 = pneg %p84
        $region18: #{tpu_custom_call.1} parent=11 // pred_check_branch
          %140 = sbr.rel (%p138) target = $region20
        $region19: #{tpu_custom_call.1} parent=11 // pred_region
          %s142 = ssub.s32 128, 128
          %143 = vsyncadd [#allocation6], %s142
          %s145 = sshll.u32 [#allocation7], 4
          %s146 = int_to_ptr.vmem [resolvable:$true] %s145
          %148 = dma.hbm_to_vmem [thread:$0]  %s2, 128, %s146, [#allocation6]
        $region20: #{tpu_custom_call.1} parent=11 // pred_fallthru
          _
      $region12: #{tpu_custom_call.1} parent=5 // pred_fallthru
        _
      %p149 = scmp.lt.s32.totalorder %s16, 2
      // Predicated region
      $region21: #{tpu_custom_call.1} parent=5 // pred_check
        %p150 = pneg %p149
      $region22: #{tpu_custom_call.1} parent=5 // pred_check_branch
        %152 = sbr.rel (%p150) target = $region24
      $region23: #{tpu_custom_call.1} parent=5 // pred_region
        // Predicated region
        $region25: #{tpu_custom_call.1} parent=23 // pred_check
          %p153 = pneg %p36
        $region26: #{tpu_custom_call.1} parent=23 // pred_check_branch
          %155 = sbr.rel (%p153) target = $region28
        $region27: #{tpu_custom_call.1} parent=23 // pred_region
          %s156 = sand.u32 %s26, 1
          %s157 = scalar_lea.sflag [#allocation3], %s156
          %s158 = sand.u32 %s26, 1
          %s159 = smul.addr %s158, 32
          %s160 = scalar_lea.vmem [#allocation2], %s159
          %s161 = smul.u32 4, %s16
          %s163 = ssub.s32 512, 512
          %164 = vsyncadd %s157, %s163
          %s165 = smul.addr %s161, 128
          %s166 = scalar_lea.hbm %s0, %s165
          %s167 = sshll.u32 %s160, 4
          %s168 = int_to_ptr.vmem [resolvable:$true] %s167
          %173 = dma.hbm_to_vmem [thread:$0]  %s166, 512, %s168, %s157, 128, 128, 8
        $region28: #{tpu_custom_call.1} parent=23 // pred_fallthru
          _
      $region24: #{tpu_custom_call.1} parent=5 // pred_fallthru
        _
      %p174 = scmp.le.s32.totalorder 1, %s16
      %p175 = scmp.lt.s32.totalorder %s16, 3
      %p176 = pnand %p174, %p175
      %p177 = pneg %p176
      // Predicated region
      $region29: #{tpu_custom_call.1} parent=5 // pred_check
        _
      $region30: #{tpu_custom_call.1} parent=5 // pred_check_branch
        %179 = sbr.rel (%p176) target = $region32
      $region31: #{tpu_custom_call.1} parent=5 // pred_region
        %s180 = ssub.s32 %s16, 1
        %s181 = sand.u32 %s29, 1
        %s182 = scalar_lea.sflag [#allocation3], %s181
        %s183 = sand.u32 %s29, 1
        %s184 = smul.addr %s183, 32
        %s185 = scalar_lea.vmem [#allocation2], %s184
        // Predicated region
        $region33: #{tpu_custom_call.1} parent=31 // pred_check
          %p186 = pneg %p42
        $region34: #{tpu_custom_call.1} parent=31 // pred_check_branch
          %188 = sbr.rel (%p186) target = $region36
        $region35: #{tpu_custom_call.1} parent=31 // pred_region
          %189 = dma.done %s182, 512
        $region36: #{tpu_custom_call.1} parent=31 // pred_fallthru
          _
        // Predicated region
        $region37: #{tpu_custom_call.1} parent=31 // pred_check
          %p190 = pneg %p63
        $region38: #{tpu_custom_call.1} parent=31 // pred_check_branch
          %192 = sbr.rel (%p190) target = $region40
        $region39: #{tpu_custom_call.1} parent=31 // pred_region
          %193 = dma.done [#allocation6], 9728
        $region40: #{tpu_custom_call.1} parent=31 // pred_fallthru
          _
        // Predicated region
        $region41: #{tpu_custom_call.1} parent=31 // pred_check
          %p194 = pneg %p84
        $region42: #{tpu_custom_call.1} parent=31 // pred_check_branch
          %196 = sbr.rel (%p194) target = $region44
        $region43: #{tpu_custom_call.1} parent=31 // pred_region
          %197 = dma.done [#allocation6], 128
        $region44: #{tpu_custom_call.1} parent=31 // pred_fallthru
          _
        %s198 = sand.u32 %s29, 1
        %s199 = scalar_lea.sflag [#allocation3], %s198
        %s200 = sand.u32 %s29, 1
        %s201 = smul.addr %s200, 32
        %s202 = scalar_lea.vmem [#allocation2], %s201
        %p203 = pneg %p42
        %p204 = pneg %p39
        %p205 = pneg %p63
        %p206 = pneg %p60
        %p207 = pneg %p84
        %p208 = pneg %p81
        %p209 = pneg %p110
        %p210 = pneg %p107
        %s211 = sand.u32 %s97, 1
        %s212 = scalar_lea.sflag [#allocation4], %s211
        %s213 = sand.u32 %s97, 1
        %s214 = smul.addr %s213, 32
        %s215 = scalar_lea.vmem [#allocation8], %s214
        %s216 = smul.u32 4, %s21
        %s217 = smul.u32 4, %s21
        %v219 = vld [vmem:[%s185] sm:$0xff]
        %v220 = vld [vmem:[%s185 + $0x8] sm:$0xff]
        %v221 = vld [vmem:[%s185 + $0x10] sm:$0xff]
        %v222 = vld [vmem:[%s185 + $0x18] sm:$0xff]
        %v223 = vpack.c.bf16 %v220, %v219
        %v224 = vpack.c.bf16 %v222, %v221
        %v225 = vld [vmem:[#allocation7] sm:$0xff]
        %v226 = vlaneseq
        %v227 = vand.u32 %v226, 127
        %v228 = vand.u32 %v227, 15
        %vm229 = vcmp.lt.s32.totalorder %v228, 8
        %v230 = vld [vmem:[#allocation5] sm:$0xf]
        %v231 = vld [vmem:[#allocation5 + $0x4] sm:$0xf]
        %v232 = vld [vmem:[#allocation5 + $0x8] sm:$0xf]
        %v233 = vld [vmem:[#allocation5 + $0xc] sm:$0xf]
        %v234 = vld [vmem:[#allocation5 + $0x10] sm:$0xf]
        %v235 = vld [vmem:[#allocation5 + $0x14] sm:$0xf]
        %v236 = vld [vmem:[#allocation5 + $0x18] sm:$0xf]
        %v237 = vld [vmem:[#allocation5 + $0x1c] sm:$0xf]
        %v238 = vlaneseq
        %v239 = vshrl.u32 %v238, 7
        %v240 = vsub.s32 0, %v239
        %v241 = vrot.slane %v225, %v240
        %v250 = vunpack.c.l.b16 %v230
        %v251 = vunpack.c.l.b16 %v231
        %v252 = vunpack.c.l.b16 %v232
        %v253 = vunpack.c.l.b16 %v233
        %v254 = vunpack.c.l.b16 %v234
        %v255 = vunpack.c.l.b16 %v235
        %v256 = vunpack.c.l.b16 %v236
        %v257 = vunpack.c.l.b16 %v237
        %v258 = vpack.c.b16 %v251, %v250
        %v259 = vpack.c.b16 %v253, %v252
        %v260 = vpack.c.b16 %v255, %v254
        %v261 = vpack.c.b16 %v257, %v256
        %vm266 = vcmask 523264
        %v268 = vsel %vm266, %v223, 0
        %v271 = vsel %vm266, %v224, 0
        %273 = vmatprep.subr.bf16.mxu0 0
        %274 = vmatpush1.bf16.msra.mxu0 %v258
        %275 = vmatprep.subr.bf16.mxu0 0
        %276 = vmatpush1.bf16.msra.mxu0 %v259
        %277 = vmatprep.subr.bf16.mxu0 0
        %278 = vmatpush1.bf16.msra.mxu0 %v260
        %279 = vmatprep.subr.bf16.mxu0 0
        %280 = vmatpush1.bf16.msra.mxu0 %v261
        %281 = vmatprep.subr.bf16.mxu0 0
        %282 = vmatpush1.bf16.msra.mxu0 0
        %283 = vmatprep.subr.bf16.mxu0 0
        %284 = vmatpush1.bf16.msra.mxu0 0
        %285 = vmatprep.subr.bf16.mxu0 0
        %286 = vmatpush1.bf16.msra.mxu0 0
        %287 = vmatprep.subr.bf16.mxu0 0
        %288 = vmatpush1.bf16.msra.mxu0 0
        %289 = vmatprep.subr.bf16.mxu0 0
        %290 = vmatpush1.bf16.msra.mxu0 0
        %291 = vmatprep.subr.bf16.mxu0 0
        %292 = vmatpush1.bf16.msra.mxu0 0
        %293 = vmatprep.subr.bf16.mxu0 0
        %294 = vmatpush1.bf16.msra.mxu0 0
        %295 = vmatprep.subr.bf16.mxu0 0
        %296 = vmatpush1.bf16.msra.mxu0 0
        %297 = vmatprep.subr.bf16.mxu0 0
        %298 = vmatpush1.bf16.msra.mxu0 0
        %299 = vmatprep.subr.bf16.mxu0 0
        %300 = vmatpush1.bf16.msra.mxu0 0
        %301 = vmatprep.subr.bf16.mxu0 0
        %302 = vmatpush1.bf16.msra.mxu0 0
        %303 = vmatprep.subr.bf16.mxu0 0
        %304 = vmatpush1.bf16.msra.mxu0 0
        %305 = vmatprep.mubr.bf16.mxu0 0
        %306 = vmatmul.mubr.bf16.gmra.mrb[0].mxu0 %v268
        %v307 = vpop.f32.mrb[0].mxu0
        %v308 = vadd.f32 %v241, %v307
        %v309 = vpop.f32.mrb[0].mxu0
        %v310 = vpop.f32.mrb[0].mxu0
        %v311 = vadd.f32 %v241, %v310
        %v312 = vpop.f32.mrb[0].mxu0
        %313 = vmatprep.mubr.bf16.mxu0 0
        %314 = vmatmul.mubr.bf16.gmra.mrb[0].mxu0 %v271
        %v315 = vpop.f32.mrb[0].mxu0
        %v316 = vadd.f32 %v241, %v315
        %v317 = vpop.f32.mrb[0].mxu0
        %v318 = vpop.f32.mrb[0].mxu0
        %v319 = vadd.f32 %v241, %v318
        %v320 = vpop.f32.mrb[0].mxu0
        %321 = vdwg.mxu0
        %v322 = vmax.f32 %v308, 0.0
        %v323 = vmax.f32 %v311, 0.0
        %v324 = vmax.f32 %v316, 0.0
        %v325 = vmax.f32 %v319, 0.0
        %v326 = vrot.slane %v322, 4
        %v327 = vadd.f32 %v322, %v326
        %v328 = vrot.slane %v327, 2
        %v329 = vadd.f32 %v327, %v328
        %v330 = vrot.slane %v329, 1
        %v331 = vadd.f32 %v329, %v330
        %v332 = vrot.slane %v323, 4
        %v333 = vadd.f32 %v323, %v332
        %v334 = vrot.slane %v333, 2
        %v335 = vadd.f32 %v333, %v334
        %v336 = vrot.slane %v335, 1
        %v337 = vadd.f32 %v335, %v336
        %v338 = vrot.slane %v324, 4
        %v339 = vadd.f32 %v324, %v338
        %v340 = vrot.slane %v339, 2
        %v341 = vadd.f32 %v339, %v340
        %v342 = vrot.slane %v341, 1
        %v343 = vadd.f32 %v341, %v342
        %v344 = vrot.slane %v325, 4
        %v345 = vadd.f32 %v325, %v344
        %v346 = vrot.slane %v345, 2
        %v347 = vadd.f32 %v345, %v346
        %v348 = vrot.slane %v347, 1
        %v349 = vadd.f32 %v347, %v348
        %v350 = vsub.f32 %v331, %v322
        %v351 = vsub.f32 %v337, %v323
        %v352 = vsub.f32 %v343, %v324
        %v353 = vsub.f32 %v349, %v325
        %v354 = vmul.f32 %v350, 0.14285715
        %v355 = vmul.f32 %v351, 0.14285715
        %v356 = vmul.f32 %v352, 0.14285715
        %v357 = vmul.f32 %v353, 0.14285715
        %v358 = vsel %vm229, %v322, %v354
        %v359 = vsel %vm229, %v323, %v355
        %v360 = vsel %vm229, %v324, %v356
        %v361 = vsel %vm229, %v325, %v357
        %v362 = vpack.c.bf16 %v359, %v358
        %v363 = vpack.c.bf16 %v361, %v360
        %v364 = vld [vmem:[#allocation5 + $0x20] sm:$0xf]
        %v365 = vld [vmem:[#allocation5 + $0x24] sm:$0xf]
        %v366 = vld [vmem:[#allocation5 + $0x28] sm:$0xf]
        %v367 = vld [vmem:[#allocation5 + $0x2c] sm:$0xf]
        %v368 = vld [vmem:[#allocation5 + $0x30] sm:$0xf]
        %v369 = vld [vmem:[#allocation5 + $0x34] sm:$0xf]
        %v370 = vld [vmem:[#allocation5 + $0x38] sm:$0xf]
        %v371 = vld [vmem:[#allocation5 + $0x3c] sm:$0xf]
        %v372 = vld [vmem:[#allocation5 + $0x40] sm:$0xf]
        %v373 = vld [vmem:[#allocation5 + $0x44] sm:$0xf]
        %v374 = vld [vmem:[#allocation5 + $0x48] sm:$0xf]
        %v375 = vld [vmem:[#allocation5 + $0x4c] sm:$0xf]
        %v376 = vld [vmem:[#allocation5 + $0x50] sm:$0xf]
        %v377 = vld [vmem:[#allocation5 + $0x54] sm:$0xf]
        %v378 = vld [vmem:[#allocation5 + $0x58] sm:$0xf]
        %v379 = vld [vmem:[#allocation5 + $0x5c] sm:$0xf]
        %v380 = vlaneseq
        %v381 = vshrl.u32 %v380, 7
        %v382 = vsub.s32 1, %v381
        %v383 = vrot.slane %v225, %v382
        %v400 = vunpack.c.l.b16 %v364
        %v401 = vunpack.c.l.b16 %v365
        %v402 = vunpack.c.l.b16 %v366
        %v403 = vunpack.c.l.b16 %v367
        %v404 = vunpack.c.l.b16 %v368
        %v405 = vunpack.c.l.b16 %v369
        %v406 = vunpack.c.l.b16 %v370
        %v407 = vunpack.c.l.b16 %v371
        %v408 = vunpack.c.l.b16 %v372
        %v409 = vunpack.c.l.b16 %v373
        %v410 = vunpack.c.l.b16 %v374
        %v411 = vunpack.c.l.b16 %v375
        %v412 = vunpack.c.l.b16 %v376
        %v413 = vunpack.c.l.b16 %v377
        %v414 = vunpack.c.l.b16 %v378
        %v415 = vunpack.c.l.b16 %v379
        %v416 = vpack.c.b16 %v401, %v400
        %v417 = vpack.c.b16 %v403, %v402
        %v418 = vpack.c.b16 %v405, %v404
        %v419 = vpack.c.b16 %v407, %v406
        %v420 = vpack.c.b16 %v409, %v408
        %v421 = vpack.c.b16 %v411, %v410
        %v422 = vpack.c.b16 %v413, %v412
        %v423 = vpack.c.b16 %v415, %v414
        %432 = vmatprep.subr.bf16.mxu0 0
        %433 = vmatpush1.bf16.msra.mxu0 %v416
        %434 = vmatprep.subr.bf16.mxu0 0
        %435 = vmatpush1.bf16.msra.mxu0 %v417
        %436 = vmatprep.subr.bf16.mxu0 0
        %437 = vmatpush1.bf16.msra.mxu0 %v418
        %438 = vmatprep.subr.bf16.mxu0 0
        %439 = vmatpush1.bf16.msra.mxu0 %v419
        %440 = vmatprep.subr.bf16.mxu0 0
        %441 = vmatpush1.bf16.msra.mxu0 %v420
        %442 = vmatprep.subr.bf16.mxu0 0
        %443 = vmatpush1.bf16.msra.mxu0 %v421
        %444 = vmatprep.subr.bf16.mxu0 0
        %445 = vmatpush1.bf16.msra.mxu0 %v422
        %446 = vmatprep.subr.bf16.mxu0 0
        %447 = vmatpush1.bf16.msra.mxu0 %v423
        %448 = vmatprep.subr.bf16.mxu0 0
        %449 = vmatpush1.bf16.msra.mxu0 0
        %450 = vmatprep.subr.bf16.mxu0 0
        %451 = vmatpush1.bf16.msra.mxu0 0
        %452 = vmatprep.subr.bf16.mxu0 0
        %453 = vmatpush1.bf16.msra.mxu0 0
        %454 = vmatprep.subr.bf16.mxu0 0
        %455 = vmatpush1.bf16.msra.mxu0 0
        %456 = vmatprep.subr.bf16.mxu0 0
        %457 = vmatpush1.bf16.msra.mxu0 0
        %458 = vmatprep.subr.bf16.mxu0 0
        %459 = vmatpush1.bf16.msra.mxu0 0
        %460 = vmatprep.subr.bf16.mxu0 0
        %461 = vmatpush1.bf16.msra.mxu0 0
        %462 = vmatprep.subr.bf16.mxu0 0
        %463 = vmatpush1.bf16.msra.mxu0 0
        %464 = vmatprep.mubr.bf16.mxu0 0
        %465 = vmatmul.mubr.bf16.gmra.mrb[0].mxu0 %v362
        %v466 = vpop.f32.mrb[0].mxu0
        %v467 = vadd.f32 %v383, %v466
        %v468 = vpop.f32.mrb[0].mxu0
        %v469 = vpop.f32.mrb[0].mxu0
        %v470 = vadd.f32 %v383, %v469
        %v471 = vpop.f32.mrb[0].mxu0
        %472 = vmatprep.mubr.bf16.mxu0 0
        %473 = vmatmul.mubr.bf16.gmra.mrb[0].mxu0 %v363
        %v474 = vpop.f32.mrb[0].mxu0
        %v475 = vadd.f32 %v383, %v474
        %v476 = vpop.f32.mrb[0].mxu0
        %v477 = vpop.f32.mrb[0].mxu0
        %v478 = vadd.f32 %v383, %v477
        %v479 = vpop.f32.mrb[0].mxu0
        %480 = vdwg.mxu0
        %v481 = vrot.slane %v467, 4
        %v482 = vadd.f32 %v467, %v481
        %v483 = vrot.slane %v482, 2
        %v484 = vadd.f32 %v482, %v483
        %v485 = vrot.slane %v484, 1
        %v486 = vadd.f32 %v484, %v485
        %v487 = vrot.slane %v470, 4
        %v488 = vadd.f32 %v470, %v487
        %v489 = vrot.slane %v488, 2
        %v490 = vadd.f32 %v488, %v489
        %v491 = vrot.slane %v490, 1
        %v492 = vadd.f32 %v490, %v491
        %v493 = vrot.slane %v475, 4
        %v494 = vadd.f32 %v475, %v493
        %v495 = vrot.slane %v494, 2
        %v496 = vadd.f32 %v494, %v495
        %v497 = vrot.slane %v496, 1
        %v498 = vadd.f32 %v496, %v497
        %v499 = vrot.slane %v478, 4
        %v500 = vadd.f32 %v478, %v499
        %v501 = vrot.slane %v500, 2
        %v502 = vadd.f32 %v500, %v501
        %v503 = vrot.slane %v502, 1
        %v504 = vadd.f32 %v502, %v503
        %v505 = vsub.f32 %v486, %v467
        %v506 = vsub.f32 %v492, %v470
        %v507 = vsub.f32 %v498, %v475
        %v508 = vsub.f32 %v504, %v478
        %v509 = vmul.f32 %v505, 0.14285715
        %v510 = vmul.f32 %v506, 0.14285715
        %v511 = vmul.f32 %v507, 0.14285715
        %v512 = vmul.f32 %v508, 0.14285715
        %v513 = vsel %vm229, %v467, %v509
        %v514 = vsel %vm229, %v470, %v510
        %v515 = vsel %vm229, %v475, %v511
        %v516 = vsel %vm229, %v478, %v512
        %517 = vrot.lane.b32.xlu0 %v513, 16
        %v518 = vpop.permute.xlu0 %517
        %519 = vrot.lane.b32.xlu0 %v514, 16
        %v520 = vpop.permute.xlu0 %519
        %521 = vrot.lane.b32.xlu0 %v515, 16
        %v522 = vpop.permute.xlu0 %521
        %523 = vrot.lane.b32.xlu0 %v516, 16
        %v524 = vpop.permute.xlu0 %523
        %v525 = vadd.f32 %v513, %v518
        %v526 = vadd.f32 %v514, %v520
        %v527 = vadd.f32 %v515, %v522
        %v528 = vadd.f32 %v516, %v524
        %529 = vrot.lane.b32.xlu0 %v525, 32
        %v530 = vpop.permute.xlu0 %529
        %531 = vrot.lane.b32.xlu0 %v526, 32
        %v532 = vpop.permute.xlu0 %531
        %533 = vrot.lane.b32.xlu0 %v527, 32
        %v534 = vpop.permute.xlu0 %533
        %535 = vrot.lane.b32.xlu0 %v528, 32
        %v536 = vpop.permute.xlu0 %535
        %v537 = vadd.f32 %v525, %v530
        %v538 = vadd.f32 %v526, %v532
        %v539 = vadd.f32 %v527, %v534
        %v540 = vadd.f32 %v528, %v536
        %541 = vrot.lane.b32.xlu0 %v537, 64
        %v542 = vpop.permute.xlu0 %541
        %543 = vrot.lane.b32.xlu0 %v538, 64
        %v544 = vpop.permute.xlu0 %543
        %545 = vrot.lane.b32.xlu0 %v539, 64
        %v546 = vpop.permute.xlu0 %545
        %547 = vrot.lane.b32.xlu0 %v540, 64
        %v548 = vpop.permute.xlu0 %547
        %v549 = vadd.f32 %v537, %v542
        %v550 = vadd.f32 %v538, %v544
        %v551 = vadd.f32 %v539, %v546
        %v552 = vadd.f32 %v540, %v548
        %v553 = vsub.f32 %v549, %v513
        %v554 = vsub.f32 %v550, %v514
        %v555 = vsub.f32 %v551, %v515
        %v556 = vsub.f32 %v552, %v516
        %v557 = vmul.f32 %v553, 0.14285715
        %v558 = vmul.f32 %v554, 0.14285715
        %v559 = vmul.f32 %v555, 0.14285715
        %v560 = vmul.f32 %v556, 0.14285715
        %v561 = vld [vmem:[#allocation5 + $0x60] sm:$0xf]
        %v562 = vld [vmem:[#allocation5 + $0x64] sm:$0xf]
        %v563 = vld [vmem:[#allocation5 + $0x68] sm:$0xf]
        %v564 = vld [vmem:[#allocation5 + $0x6c] sm:$0xf]
        %v565 = vld [vmem:[#allocation5 + $0x70] sm:$0xf]
        %v566 = vld [vmem:[#allocation5 + $0x74] sm:$0xf]
        %v567 = vld [vmem:[#allocation5 + $0x78] sm:$0xf]
        %v568 = vld [vmem:[#allocation5 + $0x7c] sm:$0xf]
        %v569 = vpack.c.bf16 %v558, %v557
        %v570 = vpack.c.bf16 %v560, %v559
        %v571 = vld [vmem:[#allocation5 + $0x80] sm:$0xf]
        %v572 = vld [vmem:[#allocation5 + $0x84] sm:$0xf]
        %v573 = vld [vmem:[#allocation5 + $0x88] sm:$0xf]
        %v574 = vld [vmem:[#allocation5 + $0x8c] sm:$0xf]
        %v575 = vld [vmem:[#allocation5 + $0x90] sm:$0xf]
        %v576 = vld [vmem:[#allocation5 + $0x94] sm:$0xf]
        %v577 = vld [vmem:[#allocation5 + $0x98] sm:$0xf]
        %v578 = vld [vmem:[#allocation5 + $0x9c] sm:$0xf]
        %v579 = vld [vmem:[#allocation5 + $0xa0] sm:$0xf]
        %v580 = vld [vmem:[#allocation5 + $0xa4] sm:$0xf]
        %v581 = vld [vmem:[#allocation5 + $0xa8] sm:$0xf]
        %v582 = vld [vmem:[#allocation5 + $0xac] sm:$0xf]
        %v583 = vld [vmem:[#allocation5 + $0xb0] sm:$0xf]
        %v584 = vld [vmem:[#allocation5 + $0xb4] sm:$0xf]
        %v585 = vld [vmem:[#allocation5 + $0xb8] sm:$0xf]
        %v586 = vld [vmem:[#allocation5 + $0xbc] sm:$0xf]
        %v603 = vunpack.c.l.b16 %v571
        %v604 = vunpack.c.l.b16 %v572
        %v605 = vunpack.c.l.b16 %v573
        %v606 = vunpack.c.l.b16 %v574
        %v607 = vunpack.c.l.b16 %v575
        %v608 = vunpack.c.l.b16 %v576
        %v609 = vunpack.c.l.b16 %v577
        %v610 = vunpack.c.l.b16 %v578
        %v611 = vunpack.c.l.b16 %v579
        %v612 = vunpack.c.l.b16 %v580
        %v613 = vunpack.c.l.b16 %v581
        %v614 = vunpack.c.l.b16 %v582
        %v615 = vunpack.c.l.b16 %v583
        %v616 = vunpack.c.l.b16 %v584
        %v617 = vunpack.c.l.b16 %v585
        %v618 = vunpack.c.l.b16 %v586
        %v619 = vpack.c.b16 %v604, %v603
        %v620 = vpack.c.b16 %v606, %v605
        %v621 = vpack.c.b16 %v608, %v607
        %v622 = vpack.c.b16 %v610, %v609
        %v623 = vpack.c.b16 %v612, %v611
        %v624 = vpack.c.b16 %v614, %v613
        %v625 = vpack.c.b16 %v616, %v615
        %v626 = vpack.c.b16 %v618, %v617
        %635 = vmatprep.subr.bf16.mxu0 0
        %636 = vmatpush1.bf16.msra.mxu0 %v619
        %637 = vmatprep.subr.bf16.mxu0 0
        %638 = vmatpush1.bf16.msra.mxu0 %v620
        %639 = vmatprep.subr.bf16.mxu0 0
        %640 = vmatpush1.bf16.msra.mxu0 %v621
        %641 = vmatprep.subr.bf16.mxu0 0
        %642 = vmatpush1.bf16.msra.mxu0 %v622
        %643 = vmatprep.subr.bf16.mxu0 0
        %644 = vmatpush1.bf16.msra.mxu0 %v623
        %645 = vmatprep.subr.bf16.mxu0 0
        %646 = vmatpush1.bf16.msra.mxu0 %v624
        %647 = vmatprep.subr.bf16.mxu0 0
        %648 = vmatpush1.bf16.msra.mxu0 %v625
        %649 = vmatprep.subr.bf16.mxu0 0
        %650 = vmatpush1.bf16.msra.mxu0 %v626
        %651 = vmatprep.subr.bf16.mxu0 0
        %652 = vmatpush1.bf16.msra.mxu0 0
        %653 = vmatprep.subr.bf16.mxu0 0
        %654 = vmatpush1.bf16.msra.mxu0 0
        %655 = vmatprep.subr.bf16.mxu0 0
        %656 = vmatpush1.bf16.msra.mxu0 0
        %657 = vmatprep.subr.bf16.mxu0 0
        %658 = vmatpush1.bf16.msra.mxu0 0
        %659 = vmatprep.subr.bf16.mxu0 0
        %660 = vmatpush1.bf16.msra.mxu0 0
        %661 = vmatprep.subr.bf16.mxu0 0
        %662 = vmatpush1.bf16.msra.mxu0 0
        %663 = vmatprep.subr.bf16.mxu0 0
        %664 = vmatpush1.bf16.msra.mxu0 0
        %665 = vmatprep.subr.bf16.mxu0 0
        %666 = vmatpush1.bf16.msra.mxu0 0
        %667 = vmatprep.mubr.bf16.mxu0 0
        %668 = vmatmul.mubr.bf16.gmra.mrb[0].mxu0 %v569
        %v669 = vpop.f32.mrb[0].mxu0
        %v670 = vadd.f32 0.0, %v669
        %v671 = vpop.f32.mrb[0].mxu0
        %v672 = vpop.f32.mrb[0].mxu0
        %v673 = vadd.f32 0.0, %v672
        %v674 = vpop.f32.mrb[0].mxu0
        %675 = vmatprep.mubr.bf16.mxu0 0
        %676 = vmatmul.mubr.bf16.gmra.mrb[0].mxu0 %v570
        %v677 = vpop.f32.mrb[0].mxu0
        %v678 = vadd.f32 0.0, %v677
        %v679 = vpop.f32.mrb[0].mxu0
        %v680 = vpop.f32.mrb[0].mxu0
        %v681 = vadd.f32 0.0, %v680
        %v682 = vpop.f32.mrb[0].mxu0
        %683 = vdwg.mxu0
        %v692 = vunpack.c.l.b16 %v561
        %v693 = vunpack.c.l.b16 %v562
        %v694 = vunpack.c.l.b16 %v563
        %v695 = vunpack.c.l.b16 %v564
        %v696 = vunpack.c.l.b16 %v565
        %v697 = vunpack.c.l.b16 %v566
        %v698 = vunpack.c.l.b16 %v567
        %v699 = vunpack.c.l.b16 %v568
        %v700 = vpack.c.b16 %v693, %v692
        %v701 = vpack.c.b16 %v695, %v694
        %v702 = vpack.c.b16 %v697, %v696
        %v703 = vpack.c.b16 %v699, %v698
        %708 = vmatprep.subr.bf16.mxu0 0
        %709 = vmatpush1.bf16.msra.mxu0 %v700
        %710 = vmatprep.subr.bf16.mxu0 0
        %711 = vmatpush1.bf16.msra.mxu0 %v701
        %712 = vmatprep.subr.bf16.mxu0 0
        %713 = vmatpush1.bf16.msra.mxu0 %v702
        %714 = vmatprep.subr.bf16.mxu0 0
        %715 = vmatpush1.bf16.msra.mxu0 %v703
        %716 = vmatprep.subr.bf16.mxu0 0
        %717 = vmatpush1.bf16.msra.mxu0 0
        %718 = vmatprep.subr.bf16.mxu0 0
        %719 = vmatpush1.bf16.msra.mxu0 0
        %720 = vmatprep.subr.bf16.mxu0 0
        %721 = vmatpush1.bf16.msra.mxu0 0
        %722 = vmatprep.subr.bf16.mxu0 0
        %723 = vmatpush1.bf16.msra.mxu0 0
        %724 = vmatprep.subr.bf16.mxu0 0
        %725 = vmatpush1.bf16.msra.mxu0 0
        %726 = vmatprep.subr.bf16.mxu0 0
        %727 = vmatpush1.bf16.msra.mxu0 0
        %728 = vmatprep.subr.bf16.mxu0 0
        %729 = vmatpush1.bf16.msra.mxu0 0
        %730 = vmatprep.subr.bf16.mxu0 0
        %731 = vmatpush1.bf16.msra.mxu0 0
        %732 = vmatprep.subr.bf16.mxu0 0
        %733 = vmatpush1.bf16.msra.mxu0 0
        %734 = vmatprep.subr.bf16.mxu0 0
        %735 = vmatpush1.bf16.msra.mxu0 0
        %736 = vmatprep.subr.bf16.mxu0 0
        %737 = vmatpush1.bf16.msra.mxu0 0
        %738 = vmatprep.subr.bf16.mxu0 0
        %739 = vmatpush1.bf16.msra.mxu0 0
        %740 = vmatprep.mubr.bf16.mxu0 0
        %741 = vmatmul.mubr.bf16.gmra.mrb[0].mxu0 %v268
        %v742 = vpop.f32.mrb[0].mxu0
        %v743 = vadd.f32 %v670, %v742
        %v744 = vpop.f32.mrb[0].mxu0
        %v745 = vpop.f32.mrb[0].mxu0
        %v746 = vadd.f32 %v673, %v745
        %v747 = vpop.f32.mrb[0].mxu0
        %748 = vmatprep.mubr.bf16.mxu0 0
        %749 = vmatmul.mubr.bf16.gmra.mrb[0].mxu0 %v271
        %v750 = vpop.f32.mrb[0].mxu0
        %v751 = vadd.f32 %v678, %v750
        %v752 = vpop.f32.mrb[0].mxu0
        %v753 = vpop.f32.mrb[0].mxu0
        %v754 = vadd.f32 %v681, %v753
        %v755 = vpop.f32.mrb[0].mxu0
        %756 = vdwg.mxu0
        %v757 = vlaneseq
        %v758 = vshrl.u32 %v757, 7
        %v759 = vsub.s32 2, %v758
        %v760 = vrot.slane %v225, %v759
        %v761 = vadd.f32 %v743, %v760
        %v762 = vadd.f32 %v746, %v760
        %v763 = vadd.f32 %v751, %v760
        %v764 = vadd.f32 %v754, %v760
        %v765 = vmax.f32 %v761, 0.0
        %v766 = vmax.f32 %v762, 0.0
        %v767 = vmax.f32 %v763, 0.0
        %v768 = vmax.f32 %v764, 0.0
        %v769 = vrot.slane %v765, 4
        %v770 = vadd.f32 %v765, %v769
        %v771 = vrot.slane %v770, 2
        %v772 = vadd.f32 %v770, %v771
        %v773 = vrot.slane %v772, 1
        %v774 = vadd.f32 %v772, %v773
        %v775 = vrot.slane %v766, 4
        %v776 = vadd.f32 %v766, %v775
        %v777 = vrot.slane %v776, 2
        %v778 = vadd.f32 %v776, %v777
        %v779 = vrot.slane %v778, 1
        %v780 = vadd.f32 %v778, %v779
        %v781 = vrot.slane %v767, 4
        %v782 = vadd.f32 %v767, %v781
        %v783 = vrot.slane %v782, 2
        %v784 = vadd.f32 %v782, %v783
        %v785 = vrot.slane %v784, 1
        %v786 = vadd.f32 %v784, %v785
        %v787 = vrot.slane %v768, 4
        %v788 = vadd.f32 %v768, %v787
        %v789 = vrot.slane %v788, 2
        %v790 = vadd.f32 %v788, %v789
        %v791 = vrot.slane %v790, 1
        %v792 = vadd.f32 %v790, %v791
        %v793 = vsub.f32 %v774, %v765
        %v794 = vsub.f32 %v780, %v766
        %v795 = vsub.f32 %v786, %v767
        %v796 = vsub.f32 %v792, %v768
        %v797 = vmul.f32 %v793, 0.14285715
        %v798 = vmul.f32 %v794, 0.14285715
        %v799 = vmul.f32 %v795, 0.14285715
        %v800 = vmul.f32 %v796, 0.14285715
        %v801 = vsel %vm229, %v765, %v797
        %v802 = vsel %vm229, %v766, %v798
        %v803 = vsel %vm229, %v767, %v799
        %v804 = vsel %vm229, %v768, %v800
        %v805 = vpack.c.bf16 %v802, %v801
        %v806 = vpack.c.bf16 %v804, %v803
        %v807 = vld [vmem:[#allocation5 + $0xc0] sm:$0xf]
        %v808 = vld [vmem:[#allocation5 + $0xc4] sm:$0xf]
        %v809 = vld [vmem:[#allocation5 + $0xc8] sm:$0xf]
        %v810 = vld [vmem:[#allocation5 + $0xcc] sm:$0xf]
        %v811 = vld [vmem:[#allocation5 + $0xd0] sm:$0xf]
        %v812 = vld [vmem:[#allocation5 + $0xd4] sm:$0xf]
        %v813 = vld [vmem:[#allocation5 + $0xd8] sm:$0xf]
        %v814 = vld [vmem:[#allocation5 + $0xdc] sm:$0xf]
        %v815 = vld [vmem:[#allocation5 + $0xe0] sm:$0xf]
        %v816 = vld [vmem:[#allocation5 + $0xe4] sm:$0xf]
        %v817 = vld [vmem:[#allocation5 + $0xe8] sm:$0xf]
        %v818 = vld [vmem:[#allocation5 + $0xec] sm:$0xf]
        %v819 = vld [vmem:[#allocation5 + $0xf0] sm:$0xf]
        %v820 = vld [vmem:[#allocation5 + $0xf4] sm:$0xf]
        %v821 = vld [vmem:[#allocation5 + $0xf8] sm:$0xf]
        %v822 = vld [vmem:[#allocation5 + $0xfc] sm:$0xf]
        %v823 = vlaneseq
        %v824 = vshrl.u32 %v823, 7
        %v825 = vsub.s32 3, %v824
        %v826 = vrot.slane %v225, %v825
        %v843 = vunpack.c.l.b16 %v807
        %v844 = vunpack.c.l.b16 %v808
        %v845 = vunpack.c.l.b16 %v809
        %v846 = vunpack.c.l.b16 %v810
        %v847 = vunpack.c.l.b16 %v811
        %v848 = vunpack.c.l.b16 %v812
        %v849 = vunpack.c.l.b16 %v813
        %v850 = vunpack.c.l.b16 %v814
        %v851 = vunpack.c.l.b16 %v815
        %v852 = vunpack.c.l.b16 %v816
        %v853 = vunpack.c.l.b16 %v817
        %v854 = vunpack.c.l.b16 %v818
        %v855 = vunpack.c.l.b16 %v819
        %v856 = vunpack.c.l.b16 %v820
        %v857 = vunpack.c.l.b16 %v821
        %v858 = vunpack.c.l.b16 %v822
        %v859 = vpack.c.b16 %v844, %v843
        %v860 = vpack.c.b16 %v846, %v845
        %v861 = vpack.c.b16 %v848, %v847
        %v862 = vpack.c.b16 %v850, %v849
        %v863 = vpack.c.b16 %v852, %v851
        %v864 = vpack.c.b16 %v854, %v853
        %v865 = vpack.c.b16 %v856, %v855
        %v866 = vpack.c.b16 %v858, %v857
        %875 = vmatprep.subr.bf16.mxu0 0
        %876 = vmatpush1.bf16.msra.mxu0 %v859
        %877 = vmatprep.subr.bf16.mxu0 0
        %878 = vmatpush1.bf16.msra.mxu0 %v860
        %879 = vmatprep.subr.bf16.mxu0 0
        %880 = vmatpush1.bf16.msra.mxu0 %v861
        %881 = vmatprep.subr.bf16.mxu0 0
        %882 = vmatpush1.bf16.msra.mxu0 %v862
        %883 = vmatprep.subr.bf16.mxu0 0
        %884 = vmatpush1.bf16.msra.mxu0 %v863
        %885 = vmatprep.subr.bf16.mxu0 0
        %886 = vmatpush1.bf16.msra.mxu0 %v864
        %887 = vmatprep.subr.bf16.mxu0 0
        %888 = vmatpush1.bf16.msra.mxu0 %v865
        %889 = vmatprep.subr.bf16.mxu0 0
        %890 = vmatpush1.bf16.msra.mxu0 %v866
        %891 = vmatprep.subr.bf16.mxu0 0
        %892 = vmatpush1.bf16.msra.mxu0 0
        %893 = vmatprep.subr.bf16.mxu0 0
        %894 = vmatpush1.bf16.msra.mxu0 0
        %895 = vmatprep.subr.bf16.mxu0 0
        %896 = vmatpush1.bf16.msra.mxu0 0
        %897 = vmatprep.subr.bf16.mxu0 0
        %898 = vmatpush1.bf16.msra.mxu0 0
        %899 = vmatprep.subr.bf16.mxu0 0
        %900 = vmatpush1.bf16.msra.mxu0 0
        %901 = vmatprep.subr.bf16.mxu0 0
        %902 = vmatpush1.bf16.msra.mxu0 0
        %903 = vmatprep.subr.bf16.mxu0 0
        %904 = vmatpush1.bf16.msra.mxu0 0
        %905 = vmatprep.subr.bf16.mxu0 0
        %906 = vmatpush1.bf16.msra.mxu0 0
        %907 = vmatprep.mubr.bf16.mxu0 0
        %908 = vmatmul.mubr.bf16.gmra.mrb[0].mxu0 %v805
        %v909 = vpop.f32.mrb[0].mxu0
        %v910 = vadd.f32 %v826, %v909
        %v911 = vpop.f32.mrb[0].mxu0
        %v912 = vpop.f32.mrb[0].mxu0
        %v913 = vadd.f32 %v826, %v912
        %v914 = vpop.f32.mrb[0].mxu0
        %915 = vmatprep.mubr.bf16.mxu0 0
        %916 = vmatmul.mubr.bf16.gmra.mrb[0].mxu0 %v806
        %v917 = vpop.f32.mrb[0].mxu0
        %v918 = vadd.f32 %v826, %v917
        %v919 = vpop.f32.mrb[0].mxu0
        %v920 = vpop.f32.mrb[0].mxu0
        %v921 = vadd.f32 %v826, %v920
        %v922 = vpop.f32.mrb[0].mxu0
        %923 = vdwg.mxu0
        %v924 = vmax.f32 %v910, 0.0
        %v925 = vmax.f32 %v913, 0.0
        %v926 = vmax.f32 %v918, 0.0
        %v927 = vmax.f32 %v921, 0.0
        %v928 = vrot.slane %v924, 4
        %v929 = vadd.f32 %v924, %v928
        %v930 = vrot.slane %v929, 2
        %v931 = vadd.f32 %v929, %v930
        %v932 = vrot.slane %v931, 1
        %v933 = vadd.f32 %v931, %v932
        %v934 = vrot.slane %v925, 4
        %v935 = vadd.f32 %v925, %v934
        %v936 = vrot.slane %v935, 2
        %v937 = vadd.f32 %v935, %v936
        %v938 = vrot.slane %v937, 1
        %v939 = vadd.f32 %v937, %v938
        %v940 = vrot.slane %v926, 4
        %v941 = vadd.f32 %v926, %v940
        %v942 = vrot.slane %v941, 2
        %v943 = vadd.f32 %v941, %v942
        %v944 = vrot.slane %v943, 1
        %v945 = vadd.f32 %v943, %v944
        %v946 = vrot.slane %v927, 4
        %v947 = vadd.f32 %v927, %v946
        %v948 = vrot.slane %v947, 2
        %v949 = vadd.f32 %v947, %v948
        %v950 = vrot.slane %v949, 1
        %v951 = vadd.f32 %v949, %v950
        %v952 = vsub.f32 %v933, %v924
        %v953 = vsub.f32 %v939, %v925
        %v954 = vsub.f32 %v945, %v926
        %v955 = vsub.f32 %v951, %v927
        %v956 = vmul.f32 %v952, 0.14285715
        %v957 = vmul.f32 %v953, 0.14285715
        %v958 = vmul.f32 %v954, 0.14285715
        %v959 = vmul.f32 %v955, 0.14285715
        %v960 = vsel %vm229, %v924, %v956
        %v961 = vsel %vm229, %v925, %v957
        %v962 = vsel %vm229, %v926, %v958
        %v963 = vsel %vm229, %v927, %v959
        %v964 = vld [vmem:[#allocation5 + $0x100] sm:$0xf]
        %v965 = vld [vmem:[#allocation5 + $0x104] sm:$0xf]
        %v966 = vld [vmem:[#allocation5 + $0x108] sm:$0xf]
        %v967 = vld [vmem:[#allocation5 + $0x10c] sm:$0xf]
        %v968 = vld [vmem:[#allocation5 + $0x110] sm:$0xf]
        %v969 = vld [vmem:[#allocation5 + $0x114] sm:$0xf]
        %v970 = vld [vmem:[#allocation5 + $0x118] sm:$0xf]
        %v971 = vld [vmem:[#allocation5 + $0x11c] sm:$0xf]
        %v972 = vpack.c.bf16 %v961, %v960
        %v973 = vpack.c.bf16 %v963, %v962
        %v974 = vld [vmem:[#allocation5 + $0x120] sm:$0xf]
        %v975 = vld [vmem:[#allocation5 + $0x124] sm:$0xf]
        %v976 = vld [vmem:[#allocation5 + $0x128] sm:$0xf]
        %v977 = vld [vmem:[#allocation5 + $0x12c] sm:$0xf]
        %v978 = vld [vmem:[#allocation5 + $0x130] sm:$0xf]
        %v979 = vld [vmem:[#allocation5 + $0x134] sm:$0xf]
        %v980 = vld [vmem:[#allocation5 + $0x138] sm:$0xf]
        %v981 = vld [vmem:[#allocation5 + $0x13c] sm:$0xf]
        %v982 = vld [vmem:[#allocation5 + $0x140] sm:$0xf]
        %v983 = vld [vmem:[#allocation5 + $0x144] sm:$0xf]
        %v984 = vld [vmem:[#allocation5 + $0x148] sm:$0xf]
        %v985 = vld [vmem:[#allocation5 + $0x14c] sm:$0xf]
        %v986 = vld [vmem:[#allocation5 + $0x150] sm:$0xf]
        %v987 = vld [vmem:[#allocation5 + $0x154] sm:$0xf]
        %v988 = vld [vmem:[#allocation5 + $0x158] sm:$0xf]
        %v989 = vld [vmem:[#allocation5 + $0x15c] sm:$0xf]
        %v1006 = vunpack.c.l.b16 %v974
        %v1007 = vunpack.c.l.b16 %v975
        %v1008 = vunpack.c.l.b16 %v976
        %v1009 = vunpack.c.l.b16 %v977
        %v1010 = vunpack.c.l.b16 %v978
        %v1011 = vunpack.c.l.b16 %v979
        %v1012 = vunpack.c.l.b16 %v980
        %v1013 = vunpack.c.l.b16 %v981
        %v1014 = vunpack.c.l.b16 %v982
        %v1015 = vunpack.c.l.b16 %v983
        %v1016 = vunpack.c.l.b16 %v984
        %v1017 = vunpack.c.l.b16 %v985
        %v1018 = vunpack.c.l.b16 %v986
        %v1019 = vunpack.c.l.b16 %v987
        %v1020 = vunpack.c.l.b16 %v988
        %v1021 = vunpack.c.l.b16 %v989
        %v1022 = vpack.c.b16 %v1007, %v1006
        %v1023 = vpack.c.b16 %v1009, %v1008
        %v1024 = vpack.c.b16 %v1011, %v1010
        %v1025 = vpack.c.b16 %v1013, %v1012
        %v1026 = vpack.c.b16 %v1015, %v1014
        %v1027 = vpack.c.b16 %v1017, %v1016
        %v1028 = vpack.c.b16 %v1019, %v1018
        %v1029 = vpack.c.b16 %v1021, %v1020
        %1038 = vmatprep.subr.bf16.mxu0 0
        %1039 = vmatpush1.bf16.msra.mxu0 %v1022
        %1040 = vmatprep.subr.bf16.mxu0 0
        %1041 = vmatpush1.bf16.msra.mxu0 %v1023
        %1042 = vmatprep.subr.bf16.mxu0 0
        %1043 = vmatpush1.bf16.msra.mxu0 %v1024
        %1044 = vmatprep.subr.bf16.mxu0 0
        %1045 = vmatpush1.bf16.msra.mxu0 %v1025
        %1046 = vmatprep.subr.bf16.mxu0 0
        %1047 = vmatpush1.bf16.msra.mxu0 %v1026
        %1048 = vmatprep.subr.bf16.mxu0 0
        %1049 = vmatpush1.bf16.msra.mxu0 %v1027
        %1050 = vmatprep.subr.bf16.mxu0 0
        %1051 = vmatpush1.bf16.msra.mxu0 %v1028
        %1052 = vmatprep.subr.bf16.mxu0 0
        %1053 = vmatpush1.bf16.msra.mxu0 %v1029
        %1054 = vmatprep.subr.bf16.mxu0 0
        %1055 = vmatpush1.bf16.msra.mxu0 0
        %1056 = vmatprep.subr.bf16.mxu0 0
        %1057 = vmatpush1.bf16.msra.mxu0 0
        %1058 = vmatprep.subr.bf16.mxu0 0
        %1059 = vmatpush1.bf16.msra.mxu0 0
        %1060 = vmatprep.subr.bf16.mxu0 0
        %1061 = vmatpush1.bf16.msra.mxu0 0
        %1062 = vmatprep.subr.bf16.mxu0 0
        %1063 = vmatpush1.bf16.msra.mxu0 0
        %1064 = vmatprep.subr.bf16.mxu0 0
        %1065 = vmatpush1.bf16.msra.mxu0 0
        %1066 = vmatprep.subr.bf16.mxu0 0
        %1067 = vmatpush1.bf16.msra.mxu0 0
        %1068 = vmatprep.subr.bf16.mxu0 0
        %1069 = vmatpush1.bf16.msra.mxu0 0
        %1070 = vmatprep.mubr.bf16.mxu0 0
        %1071 = vmatmul.mubr.bf16.gmra.mrb[0].mxu0 %v972
        %v1072 = vpop.f32.mrb[0].mxu0
        %v1073 = vadd.f32 0.0, %v1072
        %v1074 = vpop.f32.mrb[0].mxu0
        %v1075 = vpop.f32.mrb[0].mxu0
        %v1076 = vadd.f32 0.0, %v1075
        %v1077 = vpop.f32.mrb[0].mxu0
        %1078 = vmatprep.mubr.bf16.mxu0 0
        %1079 = vmatmul.mubr.bf16.gmra.mrb[0].mxu0 %v973
        %v1080 = vpop.f32.mrb[0].mxu0
        %v1081 = vadd.f32 0.0, %v1080
        %v1082 = vpop.f32.mrb[0].mxu0
        %v1083 = vpop.f32.mrb[0].mxu0
        %v1084 = vadd.f32 0.0, %v1083
        %v1085 = vpop.f32.mrb[0].mxu0
        %1086 = vdwg.mxu0
        %v1095 = vunpack.c.l.b16 %v964
        %v1096 = vunpack.c.l.b16 %v965
        %v1097 = vunpack.c.l.b16 %v966
        %v1098 = vunpack.c.l.b16 %v967
        %v1099 = vunpack.c.l.b16 %v968
        %v1100 = vunpack.c.l.b16 %v969
        %v1101 = vunpack.c.l.b16 %v970
        %v1102 = vunpack.c.l.b16 %v971
        %v1103 = vpack.c.b16 %v1096, %v1095
        %v1104 = vpack.c.b16 %v1098, %v1097
        %v1105 = vpack.c.b16 %v1100, %v1099
        %v1106 = vpack.c.b16 %v1102, %v1101
        %1111 = vmatprep.subr.bf16.mxu0 0
        %1112 = vmatpush1.bf16.msra.mxu0 %v1103
        %1113 = vmatprep.subr.bf16.mxu0 0
        %1114 = vmatpush1.bf16.msra.mxu0 %v1104
        %1115 = vmatprep.subr.bf16.mxu0 0
        %1116 = vmatpush1.bf16.msra.mxu0 %v1105
        %1117 = vmatprep.subr.bf16.mxu0 0
        %1118 = vmatpush1.bf16.msra.mxu0 %v1106
        %1119 = vmatprep.subr.bf16.mxu0 0
        %1120 = vmatpush1.bf16.msra.mxu0 0
        %1121 = vmatprep.subr.bf16.mxu0 0
        %1122 = vmatpush1.bf16.msra.mxu0 0
        %1123 = vmatprep.subr.bf16.mxu0 0
        %1124 = vmatpush1.bf16.msra.mxu0 0
        %1125 = vmatprep.subr.bf16.mxu0 0
        %1126 = vmatpush1.bf16.msra.mxu0 0
        %1127 = vmatprep.subr.bf16.mxu0 0
        %1128 = vmatpush1.bf16.msra.mxu0 0
        %1129 = vmatprep.subr.bf16.mxu0 0
        %1130 = vmatpush1.bf16.msra.mxu0 0
        %1131 = vmatprep.subr.bf16.mxu0 0
        %1132 = vmatpush1.bf16.msra.mxu0 0
        %1133 = vmatprep.subr.bf16.mxu0 0
        %1134 = vmatpush1.bf16.msra.mxu0 0
        %1135 = vmatprep.subr.bf16.mxu0 0
        %1136 = vmatpush1.bf16.msra.mxu0 0
        %1137 = vmatprep.subr.bf16.mxu0 0
        %1138 = vmatpush1.bf16.msra.mxu0 0
        %1139 = vmatprep.subr.bf16.mxu0 0
        %1140 = vmatpush1.bf16.msra.mxu0 0
        %1141 = vmatprep.subr.bf16.mxu0 0
        %1142 = vmatpush1.bf16.msra.mxu0 0
        %1143 = vmatprep.mubr.bf16.mxu0 0
        %1144 = vmatmul.mubr.bf16.gmra.mrb[0].mxu0 %v268
        %v1145 = vpop.f32.mrb[0].mxu0
        %v1146 = vadd.f32 %v1073, %v1145
        %v1147 = vpop.f32.mrb[0].mxu0
        %v1148 = vpop.f32.mrb[0].mxu0
        %v1149 = vadd.f32 %v1076, %v1148
        %v1150 = vpop.f32.mrb[0].mxu0
        %1151 = vmatprep.mubr.bf16.mxu0 0
        %1152 = vmatmul.mubr.bf16.gmra.mrb[0].mxu0 %v271
        %v1153 = vpop.f32.mrb[0].mxu0
        %v1154 = vadd.f32 %v1081, %v1153
        %v1155 = vpop.f32.mrb[0].mxu0
        %v1156 = vpop.f32.mrb[0].mxu0
        %v1157 = vadd.f32 %v1084, %v1156
        %v1158 = vpop.f32.mrb[0].mxu0
        %1159 = vdwg.mxu0
        %v1160 = vlaneseq
        %v1161 = vshrl.u32 %v1160, 7
        %v1162 = vsub.s32 4, %v1161
        %v1163 = vrot.slane %v225, %v1162
        %v1164 = vadd.f32 %v1146, %v1163
        %v1165 = vadd.f32 %v1149, %v1163
        %v1166 = vadd.f32 %v1154, %v1163
        %v1167 = vadd.f32 %v1157, %v1163
        %v1168 = vmax.f32 %v1164, 0.0
        %v1169 = vmax.f32 %v1165, 0.0
        %v1170 = vmax.f32 %v1166, 0.0
        %v1171 = vmax.f32 %v1167, 0.0
        %v1172 = vrot.slane %v1168, 4
        %v1173 = vadd.f32 %v1168, %v1172
        %v1174 = vrot.slane %v1173, 2
        %v1175 = vadd.f32 %v1173, %v1174
        %v1176 = vrot.slane %v1175, 1
        %v1177 = vadd.f32 %v1175, %v1176
        %v1178 = vrot.slane %v1169, 4
        %v1179 = vadd.f32 %v1169, %v1178
        %v1180 = vrot.slane %v1179, 2
        %v1181 = vadd.f32 %v1179, %v1180
        %v1182 = vrot.slane %v1181, 1
        %v1183 = vadd.f32 %v1181, %v1182
        %v1184 = vrot.slane %v1170, 4
        %v1185 = vadd.f32 %v1170, %v1184
        %v1186 = vrot.slane %v1185, 2
        %v1187 = vadd.f32 %v1185, %v1186
        %v1188 = vrot.slane %v1187, 1
        %v1189 = vadd.f32 %v1187, %v1188
        %v1190 = vrot.slane %v1171, 4
        %v1191 = vadd.f32 %v1171, %v1190
        %v1192 = vrot.slane %v1191, 2
        %v1193 = vadd.f32 %v1191, %v1192
        %v1194 = vrot.slane %v1193, 1
        %v1195 = vadd.f32 %v1193, %v1194
        %v1196 = vsub.f32 %v1177, %v1168
        %v1197 = vsub.f32 %v1183, %v1169
        %v1198 = vsub.f32 %v1189, %v1170
        %v1199 = vsub.f32 %v1195, %v1171
        %v1200 = vmul.f32 %v1196, 0.14285715
        %v1201 = vmul.f32 %v1197, 0.14285715
        %v1202 = vmul.f32 %v1198, 0.14285715
        %v1203 = vmul.f32 %v1199, 0.14285715
        %v1204 = vsel %vm229, %v1168, %v1200
        %v1205 = vsel %vm229, %v1169, %v1201
        %v1206 = vsel %vm229, %v1170, %v1202
        %v1207 = vsel %vm229, %v1171, %v1203
        %v1208 = vpack.c.bf16 %v1205, %v1204
        %v1209 = vpack.c.bf16 %v1207, %v1206
        %v1210 = vld [vmem:[#allocation5 + $0x160] sm:$0xf]
        %v1211 = vld [vmem:[#allocation5 + $0x164] sm:$0xf]
        %v1212 = vld [vmem:[#allocation5 + $0x168] sm:$0xf]
        %v1213 = vld [vmem:[#allocation5 + $0x16c] sm:$0xf]
        %v1214 = vld [vmem:[#allocation5 + $0x170] sm:$0xf]
        %v1215 = vld [vmem:[#allocation5 + $0x174] sm:$0xf]
        %v1216 = vld [vmem:[#allocation5 + $0x178] sm:$0xf]
        %v1217 = vld [vmem:[#allocation5 + $0x17c] sm:$0xf]
        %v1218 = vld [vmem:[#allocation5 + $0x180] sm:$0xf]
        %v1219 = vld [vmem:[#allocation5 + $0x184] sm:$0xf]
        %v1220 = vld [vmem:[#allocation5 + $0x188] sm:$0xf]
        %v1221 = vld [vmem:[#allocation5 + $0x18c] sm:$0xf]
        %v1222 = vld [vmem:[#allocation5 + $0x190] sm:$0xf]
        %v1223 = vld [vmem:[#allocation5 + $0x194] sm:$0xf]
        %v1224 = vld [vmem:[#allocation5 + $0x198] sm:$0xf]
        %v1225 = vld [vmem:[#allocation5 + $0x19c] sm:$0xf]
        %v1226 = vlaneseq
        %v1227 = vshrl.u32 %v1226, 7
        %v1228 = vsub.s32 5, %v1227
        %v1229 = vrot.slane %v225, %v1228
        %v1246 = vunpack.c.l.b16 %v1210
        %v1247 = vunpack.c.l.b16 %v1211
        %v1248 = vunpack.c.l.b16 %v1212
        %v1249 = vunpack.c.l.b16 %v1213
        %v1250 = vunpack.c.l.b16 %v1214
        %v1251 = vunpack.c.l.b16 %v1215
        %v1252 = vunpack.c.l.b16 %v1216
        %v1253 = vunpack.c.l.b16 %v1217
        %v1254 = vunpack.c.l.b16 %v1218
        %v1255 = vunpack.c.l.b16 %v1219
        %v1256 = vunpack.c.l.b16 %v1220
        %v1257 = vunpack.c.l.b16 %v1221
        %v1258 = vunpack.c.l.b16 %v1222
        %v1259 = vunpack.c.l.b16 %v1223
        %v1260 = vunpack.c.l.b16 %v1224
        %v1261 = vunpack.c.l.b16 %v1225
        %v1262 = vpack.c.b16 %v1247, %v1246
        %v1263 = vpack.c.b16 %v1249, %v1248
        %v1264 = vpack.c.b16 %v1251, %v1250
        %v1265 = vpack.c.b16 %v1253, %v1252
        %v1266 = vpack.c.b16 %v1255, %v1254
        %v1267 = vpack.c.b16 %v1257, %v1256
        %v1268 = vpack.c.b16 %v1259, %v1258
        %v1269 = vpack.c.b16 %v1261, %v1260
        %1278 = vmatprep.subr.bf16.mxu0 0
        %1279 = vmatpush1.bf16.msra.mxu0 %v1262
        %1280 = vmatprep.subr.bf16.mxu0 0
        %1281 = vmatpush1.bf16.msra.mxu0 %v1263
        %1282 = vmatprep.subr.bf16.mxu0 0
        %1283 = vmatpush1.bf16.msra.mxu0 %v1264
        %1284 = vmatprep.subr.bf16.mxu0 0
        %1285 = vmatpush1.bf16.msra.mxu0 %v1265
        %1286 = vmatprep.subr.bf16.mxu0 0
        %1287 = vmatpush1.bf16.msra.mxu0 %v1266
        %1288 = vmatprep.subr.bf16.mxu0 0
        %1289 = vmatpush1.bf16.msra.mxu0 %v1267
        %1290 = vmatprep.subr.bf16.mxu0 0
        %1291 = vmatpush1.bf16.msra.mxu0 %v1268
        %1292 = vmatprep.subr.bf16.mxu0 0
        %1293 = vmatpush1.bf16.msra.mxu0 %v1269
        %1294 = vmatprep.subr.bf16.mxu0 0
        %1295 = vmatpush1.bf16.msra.mxu0 0
        %1296 = vmatprep.subr.bf16.mxu0 0
        %1297 = vmatpush1.bf16.msra.mxu0 0
        %1298 = vmatprep.subr.bf16.mxu0 0
        %1299 = vmatpush1.bf16.msra.mxu0 0
        %1300 = vmatprep.subr.bf16.mxu0 0
        %1301 = vmatpush1.bf16.msra.mxu0 0
        %1302 = vmatprep.subr.bf16.mxu0 0
        %1303 = vmatpush1.bf16.msra.mxu0 0
        %1304 = vmatprep.subr.bf16.mxu0 0
        %1305 = vmatpush1.bf16.msra.mxu0 0
        %1306 = vmatprep.subr.bf16.mxu0 0
        %1307 = vmatpush1.bf16.msra.mxu0 0
        %1308 = vmatprep.subr.bf16.mxu0 0
        %1309 = vmatpush1.bf16.msra.mxu0 0
        %1310 = vmatprep.mubr.bf16.mxu0 0
        %1311 = vmatmul.mubr.bf16.gmra.mrb[0].mxu0 %v1208
        %v1312 = vpop.f32.mrb[0].mxu0
        %v1313 = vadd.f32 %v1229, %v1312
        %v1314 = vpop.f32.mrb[0].mxu0
        %v1315 = vpop.f32.mrb[0].mxu0
        %v1316 = vadd.f32 %v1229, %v1315
        %v1317 = vpop.f32.mrb[0].mxu0
        %1318 = vmatprep.mubr.bf16.mxu0 0
        %1319 = vmatmul.mubr.bf16.gmra.mrb[0].mxu0 %v1209
        %v1320 = vpop.f32.mrb[0].mxu0
        %v1321 = vadd.f32 %v1229, %v1320
        %v1322 = vpop.f32.mrb[0].mxu0
        %v1323 = vpop.f32.mrb[0].mxu0
        %v1324 = vadd.f32 %v1229, %v1323
        %v1325 = vpop.f32.mrb[0].mxu0
        %1326 = vdwg.mxu0
        %v1327 = vrot.slane %v1313, 4
        %v1328 = vadd.f32 %v1313, %v1327
        %v1329 = vrot.slane %v1328, 2
        %v1330 = vadd.f32 %v1328, %v1329
        %v1331 = vrot.slane %v1330, 1
        %v1332 = vadd.f32 %v1330, %v1331
        %v1333 = vrot.slane %v1316, 4
        %v1334 = vadd.f32 %v1316, %v1333
        %v1335 = vrot.slane %v1334, 2
        %v1336 = vadd.f32 %v1334, %v1335
        %v1337 = vrot.slane %v1336, 1
        %v1338 = vadd.f32 %v1336, %v1337
        %v1339 = vrot.slane %v1321, 4
        %v1340 = vadd.f32 %v1321, %v1339
        %v1341 = vrot.slane %v1340, 2
        %v1342 = vadd.f32 %v1340, %v1341
        %v1343 = vrot.slane %v1342, 1
        %v1344 = vadd.f32 %v1342, %v1343
        %v1345 = vrot.slane %v1324, 4
        %v1346 = vadd.f32 %v1324, %v1345
        %v1347 = vrot.slane %v1346, 2
        %v1348 = vadd.f32 %v1346, %v1347
        %v1349 = vrot.slane %v1348, 1
        %v1350 = vadd.f32 %v1348, %v1349
        %v1351 = vsub.f32 %v1332, %v1313
        %v1352 = vsub.f32 %v1338, %v1316
        %v1353 = vsub.f32 %v1344, %v1321
        %v1354 = vsub.f32 %v1350, %v1324
        %v1355 = vmul.f32 %v1351, 0.14285715
        %v1356 = vmul.f32 %v1352, 0.14285715
        %v1357 = vmul.f32 %v1353, 0.14285715
        %v1358 = vmul.f32 %v1354, 0.14285715
        %v1359 = vsel %vm229, %v1313, %v1355
        %v1360 = vsel %vm229, %v1316, %v1356
        %v1361 = vsel %vm229, %v1321, %v1357
        %v1362 = vsel %vm229, %v1324, %v1358
        %1363 = vrot.lane.b32.xlu0 %v1359, 16
        %v1364 = vpop.permute.xlu0 %1363
        %1365 = vrot.lane.b32.xlu0 %v1360, 16
        %v1366 = vpop.permute.xlu0 %1365
        %1367 = vrot.lane.b32.xlu0 %v1361, 16
        %v1368 = vpop.permute.xlu0 %1367
        %1369 = vrot.lane.b32.xlu0 %v1362, 16
        %v1370 = vpop.permute.xlu0 %1369
        %v1371 = vadd.f32 %v1359, %v1364
        %v1372 = vadd.f32 %v1360, %v1366
        %v1373 = vadd.f32 %v1361, %v1368
        %v1374 = vadd.f32 %v1362, %v1370
        %1375 = vrot.lane.b32.xlu0 %v1371, 32
        %v1376 = vpop.permute.xlu0 %1375
        %1377 = vrot.lane.b32.xlu0 %v1372, 32
        %v1378 = vpop.permute.xlu0 %1377
        %1379 = vrot.lane.b32.xlu0 %v1373, 32
        %v1380 = vpop.permute.xlu0 %1379
        %1381 = vrot.lane.b32.xlu0 %v1374, 32
        %v1382 = vpop.permute.xlu0 %1381
        %v1383 = vadd.f32 %v1371, %v1376
        %v1384 = vadd.f32 %v1372, %v1378
        %v1385 = vadd.f32 %v1373, %v1380
        %v1386 = vadd.f32 %v1374, %v1382
        %1387 = vrot.lane.b32.xlu0 %v1383, 64
        %v1388 = vpop.permute.xlu0 %1387
        %1389 = vrot.lane.b32.xlu0 %v1384, 64
        %v1390 = vpop.permute.xlu0 %1389
        %1391 = vrot.lane.b32.xlu0 %v1385, 64
        %v1392 = vpop.permute.xlu0 %1391
        %1393 = vrot.lane.b32.xlu0 %v1386, 64
        %v1394 = vpop.permute.xlu0 %1393
        %v1395 = vadd.f32 %v1383, %v1388
        %v1396 = vadd.f32 %v1384, %v1390
        %v1397 = vadd.f32 %v1385, %v1392
        %v1398 = vadd.f32 %v1386, %v1394
        %v1399 = vsub.f32 %v1395, %v1359
        %v1400 = vsub.f32 %v1396, %v1360
        %v1401 = vsub.f32 %v1397, %v1361
        %v1402 = vsub.f32 %v1398, %v1362
        %v1403 = vmul.f32 %v1399, 0.14285715
        %v1404 = vmul.f32 %v1400, 0.14285715
        %v1405 = vmul.f32 %v1401, 0.14285715
        %v1406 = vmul.f32 %v1402, 0.14285715
        %v1407 = vld [vmem:[#allocation5 + $0x1a0] sm:$0xf]
        %v1408 = vld [vmem:[#allocation5 + $0x1a4] sm:$0xf]
        %v1409 = vld [vmem:[#allocation5 + $0x1a8] sm:$0xf]
        %v1410 = vld [vmem:[#allocation5 + $0x1ac] sm:$0xf]
        %v1411 = vld [vmem:[#allocation5 + $0x1b0] sm:$0xf]
        %v1412 = vld [vmem:[#allocation5 + $0x1b4] sm:$0xf]
        %v1413 = vld [vmem:[#allocation5 + $0x1b8] sm:$0xf]
        %v1414 = vld [vmem:[#allocation5 + $0x1bc] sm:$0xf]
        %v1415 = vld [vmem:[#allocation5 + $0x1c0] sm:$0xf]
        %v1416 = vld [vmem:[#allocation5 + $0x1c4] sm:$0xf]
        %v1417 = vld [vmem:[#allocation5 + $0x1c8] sm:$0xf]
        %v1418 = vld [vmem:[#allocation5 + $0x1cc] sm:$0xf]
        %v1419 = vld [vmem:[#allocation5 + $0x1d0] sm:$0xf]
        %v1420 = vld [vmem:[#allocation5 + $0x1d4] sm:$0xf]
        %v1421 = vld [vmem:[#allocation5 + $0x1d8] sm:$0xf]
        %v1422 = vld [vmem:[#allocation5 + $0x1dc] sm:$0xf]
        %v1423 = vpack.c.bf16 %v1404, %v1403
        %v1424 = vpack.c.bf16 %v1406, %v1405
        %v1425 = vld [vmem:[#allocation5 + $0x1e0] sm:$0xf]
        %v1426 = vld [vmem:[#allocation5 + $0x1e4] sm:$0xf]
        %v1427 = vld [vmem:[#allocation5 + $0x1e8] sm:$0xf]
        %v1428 = vld [vmem:[#allocation5 + $0x1ec] sm:$0xf]
        %v1429 = vld [vmem:[#allocation5 + $0x1f0] sm:$0xf]
        %v1430 = vld [vmem:[#allocation5 + $0x1f4] sm:$0xf]
        %v1431 = vld [vmem:[#allocation5 + $0x1f8] sm:$0xf]
        %v1432 = vld [vmem:[#allocation5 + $0x1fc] sm:$0xf]
        %v1433 = vld [vmem:[#allocation5 + $0x200] sm:$0xf]
        %v1434 = vld [vmem:[#allocation5 + $0x204] sm:$0xf]
        %v1435 = vld [vmem:[#allocation5 + $0x208] sm:$0xf]
        %v1436 = vld [vmem:[#allocation5 + $0x20c] sm:$0xf]
        %v1437 = vld [vmem:[#allocation5 + $0x210] sm:$0xf]
        %v1438 = vld [vmem:[#allocation5 + $0x214] sm:$0xf]
        %v1439 = vld [vmem:[#allocation5 + $0x218] sm:$0xf]
        %v1440 = vld [vmem:[#allocation5 + $0x21c] sm:$0xf]
        %v1457 = vunpack.c.l.b16 %v1425
        %v1458 = vunpack.c.l.b16 %v1426
        %v1459 = vunpack.c.l.b16 %v1427
        %v1460 = vunpack.c.l.b16 %v1428
        %v1461 = vunpack.c.l.b16 %v1429
        %v1462 = vunpack.c.l.b16 %v1430
        %v1463 = vunpack.c.l.b16 %v1431
        %v1464 = vunpack.c.l.b16 %v1432
        %v1465 = vunpack.c.l.b16 %v1433
        %v1466 = vunpack.c.l.b16 %v1434
        %v1467 = vunpack.c.l.b16 %v1435
        %v1468 = vunpack.c.l.b16 %v1436
        %v1469 = vunpack.c.l.b16 %v1437
        %v1470 = vunpack.c.l.b16 %v1438
        %v1471 = vunpack.c.l.b16 %v1439
        %v1472 = vunpack.c.l.b16 %v1440
        %v1473 = vpack.c.b16 %v1458, %v1457
        %v1474 = vpack.c.b16 %v1460, %v1459
        %v1475 = vpack.c.b16 %v1462, %v1461
        %v1476 = vpack.c.b16 %v1464, %v1463
        %v1477 = vpack.c.b16 %v1466, %v1465
        %v1478 = vpack.c.b16 %v1468, %v1467
        %v1479 = vpack.c.b16 %v1470, %v1469
        %v1480 = vpack.c.b16 %v1472, %v1471
        %1489 = vmatprep.subr.bf16.mxu0 0
        %1490 = vmatpush1.bf16.msra.mxu0 %v1473
        %1491 = vmatprep.subr.bf16.mxu0 0
        %1492 = vmatpush1.bf16.msra.mxu0 %v1474
        %1493 = vmatprep.subr.bf16.mxu0 0
        %1494 = vmatpush1.bf16.msra.mxu0 %v1475
        %1495 = vmatprep.subr.bf16.mxu0 0
        %1496 = vmatpush1.bf16.msra.mxu0 %v1476
        %1497 = vmatprep.subr.bf16.mxu0 0
        %1498 = vmatpush1.bf16.msra.mxu0 %v1477
        %1499 = vmatprep.subr.bf16.mxu0 0
        %1500 = vmatpush1.bf16.msra.mxu0 %v1478
        %1501 = vmatprep.subr.bf16.mxu0 0
        %1502 = vmatpush1.bf16.msra.mxu0 %v1479
        %1503 = vmatprep.subr.bf16.mxu0 0
        %1504 = vmatpush1.bf16.msra.mxu0 %v1480
        %1505 = vmatprep.subr.bf16.mxu0 0
        %1506 = vmatpush1.bf16.msra.mxu0 0
        %1507 = vmatprep.subr.bf16.mxu0 0
        %1508 = vmatpush1.bf16.msra.mxu0 0
        %1509 = vmatprep.subr.bf16.mxu0 0
        %1510 = vmatpush1.bf16.msra.mxu0 0
        %1511 = vmatprep.subr.bf16.mxu0 0
        %1512 = vmatpush1.bf16.msra.mxu0 0
        %1513 = vmatprep.subr.bf16.mxu0 0
        %1514 = vmatpush1.bf16.msra.mxu0 0
        %1515 = vmatprep.subr.bf16.mxu0 0
        %1516 = vmatpush1.bf16.msra.mxu0 0
        %1517 = vmatprep.subr.bf16.mxu0 0
        %1518 = vmatpush1.bf16.msra.mxu0 0
        %1519 = vmatprep.subr.bf16.mxu0 0
        %1520 = vmatpush1.bf16.msra.mxu0 0
        %1521 = vmatprep.mubr.bf16.mxu0 0
        %1522 = vmatmul.mubr.bf16.gmra.mrb[0].mxu0 %v1423
        %v1523 = vpop.f32.mrb[0].mxu0
        %v1524 = vadd.f32 0.0, %v1523
        %v1525 = vpop.f32.mrb[0].mxu0
        %v1526 = vpop.f32.mrb[0].mxu0
        %v1527 = vadd.f32 0.0, %v1526
        %v1528 = vpop.f32.mrb[0].mxu0
        %1529 = vmatprep.mubr.bf16.mxu0 0
        %1530 = vmatmul.mubr.bf16.gmra.mrb[0].mxu0 %v1424
        %v1531 = vpop.f32.mrb[0].mxu0
        %v1532 = vadd.f32 0.0, %v1531
        %v1533 = vpop.f32.mrb[0].mxu0
        %v1534 = vpop.f32.mrb[0].mxu0
        %v1535 = vadd.f32 0.0, %v1534
        %v1536 = vpop.f32.mrb[0].mxu0
        %1537 = vdwg.mxu0
        %v1554 = vunpack.c.l.b16 %v1407
        %v1555 = vunpack.c.l.b16 %v1408
        %v1556 = vunpack.c.l.b16 %v1409
        %v1557 = vunpack.c.l.b16 %v1410
        %v1558 = vunpack.c.l.b16 %v1411
        %v1559 = vunpack.c.l.b16 %v1412
        %v1560 = vunpack.c.l.b16 %v1413
        %v1561 = vunpack.c.l.b16 %v1414
        %v1562 = vunpack.c.l.b16 %v1415
        %v1563 = vunpack.c.l.b16 %v1416
        %v1564 = vunpack.c.l.b16 %v1417
        %v1565 = vunpack.c.l.b16 %v1418
        %v1566 = vunpack.c.l.b16 %v1419
        %v1567 = vunpack.c.l.b16 %v1420
        %v1568 = vunpack.c.l.b16 %v1421
        %v1569 = vunpack.c.l.b16 %v1422
        %v1570 = vpack.c.b16 %v1555, %v1554
        %v1571 = vpack.c.b16 %v1557, %v1556
        %v1572 = vpack.c.b16 %v1559, %v1558
        %v1573 = vpack.c.b16 %v1561, %v1560
        %v1574 = vpack.c.b16 %v1563, %v1562
        %v1575 = vpack.c.b16 %v1565, %v1564
        %v1576 = vpack.c.b16 %v1567, %v1566
        %v1577 = vpack.c.b16 %v1569, %v1568
        %1586 = vmatprep.subr.bf16.mxu0 0
        %1587 = vmatpush1.bf16.msra.mxu0 %v1570
        %1588 = vmatprep.subr.bf16.mxu0 0
        %1589 = vmatpush1.bf16.msra.mxu0 %v1571
        %1590 = vmatprep.subr.bf16.mxu0 0
        %1591 = vmatpush1.bf16.msra.mxu0 %v1572
        %1592 = vmatprep.subr.bf16.mxu0 0
        %1593 = vmatpush1.bf16.msra.mxu0 %v1573
        %1594 = vmatprep.subr.bf16.mxu0 0
        %1595 = vmatpush1.bf16.msra.mxu0 %v1574
        %1596 = vmatprep.subr.bf16.mxu0 0
        %1597 = vmatpush1.bf16.msra.mxu0 %v1575
        %1598 = vmatprep.subr.bf16.mxu0 0
        %1599 = vmatpush1.bf16.msra.mxu0 %v1576
        %1600 = vmatprep.subr.bf16.mxu0 0
        %1601 = vmatpush1.bf16.msra.mxu0 %v1577
        %1602 = vmatprep.subr.bf16.mxu0 0
        %1603 = vmatpush1.bf16.msra.mxu0 0
        %1604 = vmatprep.subr.bf16.mxu0 0
        %1605 = vmatpush1.bf16.msra.mxu0 0
        %1606 = vmatprep.subr.bf16.mxu0 0
        %1607 = vmatpush1.bf16.msra.mxu0 0
        %1608 = vmatprep.subr.bf16.mxu0 0
        %1609 = vmatpush1.bf16.msra.mxu0 0
        %1610 = vmatprep.subr.bf16.mxu0 0
        %1611 = vmatpush1.bf16.msra.mxu0 0
        %1612 = vmatprep.subr.bf16.mxu0 0
        %1613 = vmatpush1.bf16.msra.mxu0 0
        %1614 = vmatprep.subr.bf16.mxu0 0
        %1615 = vmatpush1.bf16.msra.mxu0 0
        %1616 = vmatprep.subr.bf16.mxu0 0
        %1617 = vmatpush1.bf16.msra.mxu0 0
        %1618 = vmatprep.mubr.bf16.mxu0 0
        %1619 = vmatmul.mubr.bf16.gmra.mrb[0].mxu0 %v972
        %v1620 = vpop.f32.mrb[0].mxu0
        %v1621 = vadd.f32 %v1524, %v1620
        %v1622 = vpop.f32.mrb[0].mxu0
        %v1623 = vpop.f32.mrb[0].mxu0
        %v1624 = vadd.f32 %v1527, %v1623
        %v1625 = vpop.f32.mrb[0].mxu0
        %1626 = vmatprep.mubr.bf16.mxu0 0
        %1627 = vmatmul.mubr.bf16.gmra.mrb[0].mxu0 %v973
        %v1628 = vpop.f32.mrb[0].mxu0
        %v1629 = vadd.f32 %v1532, %v1628
        %v1630 = vpop.f32.mrb[0].mxu0
        %v1631 = vpop.f32.mrb[0].mxu0
        %v1632 = vadd.f32 %v1535, %v1631
        %v1633 = vpop.f32.mrb[0].mxu0
        %1634 = vdwg.mxu0
        %v1635 = vlaneseq
        %v1636 = vshrl.u32 %v1635, 7
        %v1637 = vsub.s32 6, %v1636
        %v1638 = vrot.slane %v225, %v1637
        %v1639 = vadd.f32 %v1621, %v1638
        %v1640 = vadd.f32 %v1624, %v1638
        %v1641 = vadd.f32 %v1629, %v1638
        %v1642 = vadd.f32 %v1632, %v1638
        %v1643 = vmax.f32 %v1639, 0.0
        %v1644 = vmax.f32 %v1640, 0.0
        %v1645 = vmax.f32 %v1641, 0.0
        %v1646 = vmax.f32 %v1642, 0.0
        %v1647 = vrot.slane %v1643, 4
        %v1648 = vadd.f32 %v1643, %v1647
        %v1649 = vrot.slane %v1648, 2
        %v1650 = vadd.f32 %v1648, %v1649
        %v1651 = vrot.slane %v1650, 1
        %v1652 = vadd.f32 %v1650, %v1651
        %v1653 = vrot.slane %v1644, 4
        %v1654 = vadd.f32 %v1644, %v1653
        %v1655 = vrot.slane %v1654, 2
        %v1656 = vadd.f32 %v1654, %v1655
        %v1657 = vrot.slane %v1656, 1
        %v1658 = vadd.f32 %v1656, %v1657
        %v1659 = vrot.slane %v1645, 4
        %v1660 = vadd.f32 %v1645, %v1659
        %v1661 = vrot.slane %v1660, 2
        %v1662 = vadd.f32 %v1660, %v1661
        %v1663 = vrot.slane %v1662, 1
        %v1664 = vadd.f32 %v1662, %v1663
        %v1665 = vrot.slane %v1646, 4
        %v1666 = vadd.f32 %v1646, %v1665
        %v1667 = vrot.slane %v1666, 2
        %v1668 = vadd.f32 %v1666, %v1667
        %v1669 = vrot.slane %v1668, 1
        %v1670 = vadd.f32 %v1668, %v1669
        %v1671 = vsub.f32 %v1652, %v1643
        %v1672 = vsub.f32 %v1658, %v1644
        %v1673 = vsub.f32 %v1664, %v1645
        %v1674 = vsub.f32 %v1670, %v1646
        %v1675 = vmul.f32 %v1671, 0.14285715
        %v1676 = vmul.f32 %v1672, 0.14285715
        %v1677 = vmul.f32 %v1673, 0.14285715
        %v1678 = vmul.f32 %v1674, 0.14285715
        %v1679 = vsel %vm229, %v1643, %v1675
        %v1680 = vsel %vm229, %v1644, %v1676
        %v1681 = vsel %vm229, %v1645, %v1677
        %v1682 = vsel %vm229, %v1646, %v1678
        %v1683 = vpack.c.bf16 %v1680, %v1679
        %v1684 = vpack.c.bf16 %v1682, %v1681
        %v1685 = vld [vmem:[#allocation5 + $0x220] sm:$0xf]
        %v1686 = vld [vmem:[#allocation5 + $0x224] sm:$0xf]
        %v1687 = vld [vmem:[#allocation5 + $0x228] sm:$0xf]
        %v1688 = vld [vmem:[#allocation5 + $0x22c] sm:$0xf]
        %v1689 = vld [vmem:[#allocation5 + $0x230] sm:$0xf]
        %v1690 = vld [vmem:[#allocation5 + $0x234] sm:$0xf]
        %v1691 = vld [vmem:[#allocation5 + $0x238] sm:$0xf]
        %v1692 = vld [vmem:[#allocation5 + $0x23c] sm:$0xf]
        %v1693 = vld [vmem:[#allocation5 + $0x240] sm:$0xf]
        %v1694 = vld [vmem:[#allocation5 + $0x244] sm:$0xf]
        %v1695 = vld [vmem:[#allocation5 + $0x248] sm:$0xf]
        %v1696 = vld [vmem:[#allocation5 + $0x24c] sm:$0xf]
        %v1697 = vld [vmem:[#allocation5 + $0x250] sm:$0xf]
        %v1698 = vld [vmem:[#allocation5 + $0x254] sm:$0xf]
        %v1699 = vld [vmem:[#allocation5 + $0x258] sm:$0xf]
        %v1700 = vld [vmem:[#allocation5 + $0x25c] sm:$0xf]
        %v1701 = vlaneseq
        %v1702 = vshrl.u32 %v1701, 7
        %v1703 = vsub.s32 7, %v1702
        %v1704 = vrot.slane %v225, %v1703
        %v1721 = vunpack.c.l.b16 %v1685
        %v1722 = vunpack.c.l.b16 %v1686
        %v1723 = vunpack.c.l.b16 %v1687
        %v1724 = vunpack.c.l.b16 %v1688
        %v1725 = vunpack.c.l.b16 %v1689
        %v1726 = vunpack.c.l.b16 %v1690
        %v1727 = vunpack.c.l.b16 %v1691
        %v1728 = vunpack.c.l.b16 %v1692
        %v1729 = vunpack.c.l.b16 %v1693
        %v1730 = vunpack.c.l.b16 %v1694
        %v1731 = vunpack.c.l.b16 %v1695
        %v1732 = vunpack.c.l.b16 %v1696
        %v1733 = vunpack.c.l.b16 %v1697
        %v1734 = vunpack.c.l.b16 %v1698
        %v1735 = vunpack.c.l.b16 %v1699
        %v1736 = vunpack.c.l.b16 %v1700
        %v1737 = vpack.c.b16 %v1722, %v1721
        %v1738 = vpack.c.b16 %v1724, %v1723
        %v1739 = vpack.c.b16 %v1726, %v1725
        %v1740 = vpack.c.b16 %v1728, %v1727
        %v1741 = vpack.c.b16 %v1730, %v1729
        %v1742 = vpack.c.b16 %v1732, %v1731
        %v1743 = vpack.c.b16 %v1734, %v1733
        %v1744 = vpack.c.b16 %v1736, %v1735
        %1753 = vmatprep.subr.bf16.mxu0 0
        %1754 = vmatpush1.bf16.msra.mxu0 %v1737
        %1755 = vmatprep.subr.bf16.mxu0 0
        %1756 = vmatpush1.bf16.msra.mxu0 %v1738
        %1757 = vmatprep.subr.bf16.mxu0 0
        %1758 = vmatpush1.bf16.msra.mxu0 %v1739
        %1759 = vmatprep.subr.bf16.mxu0 0
        %1760 = vmatpush1.bf16.msra.mxu0 %v1740
        %1761 = vmatprep.subr.bf16.mxu0 0
        %1762 = vmatpush1.bf16.msra.mxu0 %v1741
        %1763 = vmatprep.subr.bf16.mxu0 0
        %1764 = vmatpush1.bf16.msra.mxu0 %v1742
        %1765 = vmatprep.subr.bf16.mxu0 0
        %1766 = vmatpush1.bf16.msra.mxu0 %v1743
        %1767 = vmatprep.subr.bf16.mxu0 0
        %1768 = vmatpush1.bf16.msra.mxu0 %v1744
        %1769 = vmatprep.subr.bf16.mxu0 0
        %1770 = vmatpush1.bf16.msra.mxu0 0
        %1771 = vmatprep.subr.bf16.mxu0 0
        %1772 = vmatpush1.bf16.msra.mxu0 0
        %1773 = vmatprep.subr.bf16.mxu0 0
        %1774 = vmatpush1.bf16.msra.mxu0 0
        %1775 = vmatprep.subr.bf16.mxu0 0
        %1776 = vmatpush1.bf16.msra.mxu0 0
        %1777 = vmatprep.subr.bf16.mxu0 0
        %1778 = vmatpush1.bf16.msra.mxu0 0
        %1779 = vmatprep.subr.bf16.mxu0 0
        %1780 = vmatpush1.bf16.msra.mxu0 0
        %1781 = vmatprep.subr.bf16.mxu0 0
        %1782 = vmatpush1.bf16.msra.mxu0 0
        %1783 = vmatprep.subr.bf16.mxu0 0
        %1784 = vmatpush1.bf16.msra.mxu0 0
        %1785 = vmatprep.mubr.bf16.mxu0 0
        %1786 = vmatmul.mubr.bf16.gmra.mrb[0].mxu0 %v1683
        %v1787 = vpop.f32.mrb[0].mxu0
        %v1788 = vadd.f32 %v1704, %v1787
        %v1789 = vpop.f32.mrb[0].mxu0
        %v1790 = vpop.f32.mrb[0].mxu0
        %v1791 = vadd.f32 %v1704, %v1790
        %v1792 = vpop.f32.mrb[0].mxu0
        %1793 = vmatprep.mubr.bf16.mxu0 0
        %1794 = vmatmul.mubr.bf16.gmra.mrb[0].mxu0 %v1684
        %v1795 = vpop.f32.mrb[0].mxu0
        %v1796 = vadd.f32 %v1704, %v1795
        %v1797 = vpop.f32.mrb[0].mxu0
        %v1798 = vpop.f32.mrb[0].mxu0
        %v1799 = vadd.f32 %v1704, %v1798
        %v1800 = vpop.f32.mrb[0].mxu0
        %1801 = vdwg.mxu0
        %v1802 = vmax.f32 %v1788, 0.0
        %v1803 = vmax.f32 %v1791, 0.0
        %v1804 = vmax.f32 %v1796, 0.0
        %v1805 = vmax.f32 %v1799, 0.0
        %v1806 = vand.u32 2147483647, %v1788
        %v1807 = vand.u32 2147483647, %v1791
        %v1808 = vand.u32 2147483647, %v1796
        %v1809 = vand.u32 2147483647, %v1799
        %v1810 = vsub.f32 0.0, %v1806
        %v1811 = vsub.f32 0.0, %v1807
        %v1812 = vsub.f32 0.0, %v1808
        %v1813 = vsub.f32 0.0, %v1809
        %v1814 = vmul.f32 %v1810, 1.442695
        %v1815 = vpow.pop %v1814
        %v1816 = vmul.f32 %v1811, 1.442695
        %v1817 = vpow.pop %v1816
        %v1818 = vmul.f32 %v1812, 1.442695
        %v1819 = vpow.pop %v1818
        %v1820 = vmul.f32 %v1813, 1.442695
        %v1821 = vpow.pop %v1820
        %v1822 = vadd.f32 %v1815, 1.0
        %v1823 = vadd.f32 %v1817, 1.0
        %v1824 = vadd.f32 %v1819, 1.0
        %v1825 = vadd.f32 %v1821, 1.0
        %v1826 = vlog2.pop %v1822
        %v1827 = vmul.f32 %v1826, 0.6931472
        %v1828 = vlog2.pop %v1823
        %v1829 = vmul.f32 %v1828, 0.6931472
        %v1830 = vlog2.pop %v1824
        %v1831 = vmul.f32 %v1830, 0.6931472
        %v1832 = vlog2.pop %v1825
        %v1833 = vmul.f32 %v1832, 0.6931472
        %v1834 = vadd.f32 %v1802, %v1827
        %v1835 = vadd.f32 %v1803, %v1829
        %v1836 = vadd.f32 %v1804, %v1831
        %v1837 = vadd.f32 %v1805, %v1833
        %v1838 = vmul.f32 %v1834, 0.1
        %v1839 = vmul.f32 %v1835, 0.1
        %v1840 = vmul.f32 %v1836, 0.1
        %v1841 = vmul.f32 %v1837, 0.1
        %1842 = vst [vmem:[%s215] sm:$0xff] %v1838
        %1843 = vst [vmem:[%s215 + $0x8] sm:$0xff] %v1839
        %1844 = vst [vmem:[%s215 + $0x10] sm:$0xff] %v1840
        %1845 = vst [vmem:[%s215 + $0x18] sm:$0xff] %v1841
        %s1846 = sand.u32 %s97, 1
        %s1847 = scalar_lea.sflag [#allocation4], %s1846
        %s1848 = sand.u32 %s97, 1
        %s1849 = smul.addr %s1848, 32
        %s1850 = scalar_lea.vmem [#allocation8], %s1849
        // Predicated region
        $region45: #{tpu_custom_call.1} parent=31 // pred_check
          %p1851 = pneg %p107
        $region46: #{tpu_custom_call.1} parent=31 // pred_check_branch
          %1853 = sbr.rel (%p1851) target = $region48
        $region47: #{tpu_custom_call.1} parent=31 // pred_region
          %s1854 = smul.u32 4, %s21
          %s1856 = ssub.s32 512, 512
          %1857 = vsyncadd %s1847, %s1856
          %s1858 = smul.addr %s1854, 128
          %s1859 = scalar_lea.hbm %s3, %s1858
          %s1860 = sshll.u32 %s1850, 4
          %s1861 = int_to_ptr.vmem [resolvable:$true] %s1860
          %1866 = dma.vmem_to_hbm [thread:$0]  %s1861, 512, %s1859, %s1847, 128, 128, 8
        $region48: #{tpu_custom_call.1} parent=31 // pred_fallthru
          _
      $region32: #{tpu_custom_call.1} parent=5 // pred_fallthru
        _
      %p1867 = scmp.le.s32.totalorder 2, %s16
      // Predicated region
      $region49: #{tpu_custom_call.1} parent=5 // pred_check
        %p1868 = pneg %p1867
      $region50: #{tpu_custom_call.1} parent=5 // pred_check_branch
        %1870 = sbr.rel (%p1868) target = $region52
      $region51: #{tpu_custom_call.1} parent=5 // pred_region
        %s1871 = ssub.s32 %s16, 2
        // Predicated region
        $region53: #{tpu_custom_call.1} parent=51 // pred_check
          %p1872 = pneg %p113
        $region54: #{tpu_custom_call.1} parent=51 // pred_check_branch
          %1874 = sbr.rel (%p1872) target = $region56
        $region55: #{tpu_custom_call.1} parent=51 // pred_region
          %s1875 = sand.u32 %s98, 1
          %s1876 = scalar_lea.sflag [#allocation4], %s1875
          %s1877 = sand.u32 %s98, 1
          %s1878 = smul.addr %s1877, 32
          %s1879 = scalar_lea.vmem [#allocation8], %s1878
          %1880 = dma.done %s1876, 512
        $region56: #{tpu_custom_call.1} parent=51 // pred_fallthru
          _
      $region52: #{tpu_custom_call.1} parent=5 // pred_fallthru
        _
    $region6: #{tpu_custom_call.1} parent=1 // loop_footer
      %s20 = sadd.s32 1, %s16
    $region7: #{tpu_custom_call.1} parent=1 // loop_footer_branch
      %15 = sbr.rel target = $region3
    $region8: #{tpu_custom_call.1} parent=1 // loop_exit
      _
    %1881 = vsyncpa [#allocation3], 1
    %s1882 = scalar_lea.sflag [#allocation3], 1
    %1883 = vsyncpa %s1882, 1
    %1884 = vsyncpa [#allocation6], 1
    %1885 = vsyncpa [#allocation4], 1
    %s1886 = scalar_lea.sflag [#allocation4], 1
    %1887 = vsyncpa %s1886, 1

</llo_original>
